<compile_context>
chip_gen: v7x
topology: tpu7x:2x2x1
jax: 0.10.0
libtpu: 0.0.40
codegen_flags: <defaults>
</compile_context>

<pallas_src>
import functools

import jax
import jax.numpy as jnp
from jax.experimental import pallas as pl
from jax.experimental.pallas import tpu as pltpu


def _reorder_ifgo_to_ifog(w, H):
    """Permute the trailing 4H gate axis from PyTorch [i, f, g, o] to [i, f, o, g]."""
    return jnp.concatenate(
        [w[..., 0:2 * H], w[..., 3 * H:4 * H], w[..., 2 * H:3 * H]], axis=-1)


def _lstm_head_kernel(x0_ref, xn_ref, wih_ref, whh_ref, b_ref, wfc_ref, bfc_ref,
                      out_ref, xp_ref, h_ref, c_ref,
                      *, hidden_dim, t_chunk, seq_len):
    """One grid step = one time-chunk of the LSTM for one batch tile.

    h/c persist in VMEM scratch; xp_ref is a 2-slot buffer of per-chunk input
    projections (slot t%2 consumed here, slot (t+1)%2 filled for the next step)."""
    H = hidden_dim
    Tc = t_chunk
    t_idx = pl.program_id(1)
    n_t = pl.num_programs(1)
    tb = h_ref.shape[0]
    D = xn_ref.shape[2]

    def project(x_block):                        # (Tc, tb, D) -> (Tc, tb, 4H) f32
        # tb is sublane-pack aligned, so this reshape is a free re-view.
        x2 = x_block.reshape(Tc * tb, D)
        xp = jnp.dot(x2, wih_ref[...], preferred_element_type=jnp.float32)
        xp = xp + b_ref[...]                     # bias folded in once per chunk
        return xp.reshape(Tc, tb, 4 * H)

    # --- first time-chunk of each batch tile: init state, project chunk 0 ---
    @pl.when(t_idx == 0)
    def _init():
        h_ref[...] = jnp.zeros_like(h_ref)
        c_ref[...] = jnp.zeros_like(c_ref)
        xp_ref[0] = project(x0_ref[...])

    # --- serial recurrence over this chunk (projection computed on a previous step) ---
    whh = whh_ref[...]                           # hoisted out of the unrolled loop
    h = h_ref[...]                               # (tb, H) f32
    c = c_ref[...]
    slot = t_idx % 2
    rem = seq_len % Tc                           # static Python int
    for t in range(Tc):                          # fully unrolled (Tc <= 32)
        gates = xp_ref[slot, t] + jnp.dot(h.astype(whh.dtype), whh,
                                          preferred_element_type=jnp.float32)
        sig = jax.nn.sigmoid(gates[:, :3 * H])   # one lane-dense EUP op for i, f, o
        i_g = sig[:, 0 * H:1 * H]
        f_g = sig[:, 1 * H:2 * H]
        o_g = sig[:, 2 * H:3 * H]
        g_g = jnp.tanh(gates[:, 3 * H:])
        c_new = f_g * c + i_g * g_g
        h_new = o_g * jnp.tanh(c_new)
        if rem != 0 and t >= rem:
            # This local step is zero-padding in the final chunk: keep state unchanged.
            valid = t_idx < n_t - 1
            h = jnp.where(valid, h_new, h)
            c = jnp.where(valid, c_new, c)
        else:
            h, c = h_new, c_new
    h_ref[...] = h
    c_ref[...] = c

    # --- prefetch next chunk's input projection (independent MXU work, placed after the
    #     recurrence so its matmul overlaps the recurrence tail rather than gating it) ---
    @pl.when(t_idx + 1 < n_t)
    def _prefetch():
        xp_ref[(t_idx + 1) % 2] = project(xn_ref[...])

    # --- last time-chunk: Dropout(eval)=identity -> Linear(H, 1) -> Sigmoid ---
    @pl.when(t_idx == n_t - 1)
    def _head():
        # Elementwise mul + lane reduction instead of an N=1 MXU matmul.
        logits = jnp.sum(h * wfc_ref[...], axis=-1, keepdims=True) + bfc_ref[...]
        out_ref[...] = jax.nn.sigmoid(logits)


def rnn_model_forward(x, params, *, weights_dtype=jnp.bfloat16,
                      recurrent_dtype=jnp.float32, max_t_chunk=32, batch_tile=None):
    """x: (B, T, D) float32 (batch_first, like the PyTorch module).  Returns (B, 1) f32.

    weights_dtype:   dtype for x / W_ih (throughput-bound input projection on the MXU).
    recurrent_dtype: dtype for W_hh (latency-bound serial path; f32 default so rounding
                     does not compound over T).
    batch_tile:      rows per batch tile (must divide the padded batch and be a multiple
                     of 8); leave None to use one tile.  Multiple tiles let the parallel
                     batch grid axis shard across v7x's two TensorCores.
    """
    B, T, D = x.shape
    H = params["w_hh"].shape[1]

    pack = 16 if jnp.dtype(weights_dtype).itemsize == 2 else 8
    Bp = ((B + pack - 1) // pack) * pack          # pad batch to the sublane pack
    tb = Bp if batch_tile is None else batch_tile
    assert Bp % tb == 0 and tb % 8 == 0

    Tc = min(T, max_t_chunk)                      # time chunk (unrolled in-kernel)
    n_chunks = pl.cdiv(T, Tc)
    Tp = n_chunks * Tc                            # padded T; extra steps masked in-kernel

    x_p = x
    if Bp != B or Tp != T:
        x_p = jnp.pad(x_p, ((0, Bp - B), (0, Tp - T), (0, 0)))
    # Time-major so each per-step gate read in the kernel is a contiguous (tb, 4H) tile.
    x_p = jnp.transpose(x_p, (1, 0, 2)).astype(weights_dtype)     # (Tp, Bp, D)

    wih_t = _reorder_ifgo_to_ifog(jnp.transpose(params["w_ih"]), H).astype(weights_dtype)
    whh_t = _reorder_ifgo_to_ifog(jnp.transpose(params["w_hh"]), H).astype(recurrent_dtype)
    bias = _reorder_ifgo_to_ifog(
        (params["b_ih"] + params["b_hh"]).reshape(1, 4 * H), H).astype(jnp.float32)
    wfc_row = params["w_fc"].reshape(1, H).astype(jnp.float32)
    bfc = params["b_fc"].reshape(1, 1).astype(jnp.float32)

    kernel = functools.partial(_lstm_head_kernel, hidden_dim=H, t_chunk=Tc, seq_len=T)
    last = n_chunks - 1

    out = pl.pallas_call(
        kernel,
        out_shape=jax.ShapeDtypeStruct((Bp, 1), jnp.float32),
        grid_spec=pltpu.PrefetchScalarGridSpec(
            num_scalar_prefetch=0,
            grid=(Bp // tb, n_chunks),
            in_specs=[
                # chunk 0 of the current batch tile (used only at the first time step;
                # constant index over t so it is not re-DMA'd within a batch tile)
                pl.BlockSpec((Tc, tb, D), lambda b, t: (0, b, 0)),
                # look-ahead chunk t+1 (clamped) -- projected while the recurrence runs
                pl.BlockSpec((Tc, tb, D), lambda b, t: (jnp.minimum(t + 1, last), b, 0)),
                pl.BlockSpec((D, 4 * H), lambda b, t: (0, 0)),    # W_ih^T (resident)
                pl.BlockSpec((H, 4 * H), lambda b, t: (0, 0)),    # W_hh^T (resident)
                pl.BlockSpec((1, 4 * H), lambda b, t: (0, 0)),    # fused bias
                pl.BlockSpec((1, H), lambda b, t: (0, 0)),        # fc weight row
                pl.BlockSpec((1, 1), lambda b, t: (0, 0)),        # fc bias
            ],
            out_specs=pl.BlockSpec((tb, 1), lambda b, t: (b, 0)),
            scratch_shapes=[
                pltpu.VMEM((2, Tc, tb, 4 * H), jnp.float32),      # double-buffered x@W_ih
                pltpu.VMEM((tb, H), jnp.float32),                 # h carry
                pltpu.VMEM((tb, H), jnp.float32),                 # c carry
            ],
        ),
        compiler_params=pltpu.CompilerParams(
            dimension_semantics=("parallel", "arbitrary"),        # batch parallel, time serial
            vmem_limit_bytes=32 * 1024 * 1024,
        ),
    )(x_p, x_p, wih_t, whh_t, bias, wfc_row, bfc)

    return out[:B]


def init_params(key, input_dim, hidden_dim):
    """Deterministic init mimicking PyTorch's uniform(-1/sqrt(H), 1/sqrt(H))."""
    ks = jax.random.split(key, 6)
    bound = 1.0 / jnp.sqrt(jnp.float32(hidden_dim))
    u = lambda k, shape: jax.random.uniform(k, shape, jnp.float32, -bound, bound)
    return {
        "w_ih": u(ks[0], (4 * hidden_dim, input_dim)),
        "w_hh": u(ks[1], (4 * hidden_dim, hidden_dim)),
        "b_ih": u(ks[2], (4 * hidden_dim,)),
        "b_hh": u(ks[3], (4 * hidden_dim,)),
        "w_fc": u(ks[4], (1, hidden_dim)),
        "b_fc": u(ks[5], (1,)),
    }


def _reference_forward(x, params):
    """Pure-JAX reference (PyTorch LSTM semantics) for a sanity check."""
    H = params["w_hh"].shape[1]
    B, T, _ = x.shape
    h = jnp.zeros((B, H), jnp.float32)
    c = jnp.zeros((B, H), jnp.float32)
    for t in range(T):
        gates = (x[:, t, :] @ params["w_ih"].T + params["b_ih"]
                 + h @ params["w_hh"].T + params["b_hh"])
        i_g = jax.nn.sigmoid(gates[:, 0 * H:1 * H])
        f_g = jax.nn.sigmoid(gates[:, 1 * H:2 * H])
        g_g = jnp.tanh(gates[:, 2 * H:3 * H])
        o_g = jax.nn.sigmoid(gates[:, 3 * H:4 * H])
        c = f_g * c + i_g * g_g
        h = o_g * jnp.tanh(c)
    return jax.nn.sigmoid(h @ params["w_fc"].T + params["b_fc"])


if __name__ == "__main__":
    key = jax.random.PRNGKey(0)
    k_x, k_p, k_x2 = jax.random.split(key, 3)

    # Small demo shapes: batch=2, seq=8, input=16, hidden=32.
    B, T, D, H = 2, 8, 16, 32
    x = jax.random.normal(k_x, (B, T, D), dtype=jnp.float32)
    params = init_params(k_p, input_dim=D, hidden_dim=H)
    ref = _reference_forward(x, params)

    # f32 path: exact match against the pure-JAX reference.
    out_f32 = jax.block_until_ready(
        rnn_model_forward(x, params, weights_dtype=jnp.float32))
    assert out_f32.shape == (B, 1)
    assert jnp.allclose(out_f32, ref, atol=1e-5, rtol=1e-5)

    # Default path: bf16 x / W_ih on the MXU, f32 W_hh + gate math on the serial chain.
    out_def = jax.block_until_ready(rnn_model_forward(x, params))
    assert out_def.shape == (B, 1)
    assert jnp.allclose(out_def, ref, atol=2e-2)

    # Multi-chunk + ragged-T path: exercises the double-buffered projection pipeline and
    # the padded-time-step masking (T=11, Tc=4 -> 3 chunks, remainder 3).
    T2 = 11
    x2 = jax.random.normal(k_x2, (B, T2, D), dtype=jnp.float32)
    ref2 = _reference_forward(x2, params)
    out2 = jax.block_until_ready(
        rnn_model_forward(x2, params, weights_dtype=jnp.float32, max_t_chunk=4))
    assert out2.shape == (B, 1)
    assert jnp.allclose(out2, ref2, atol=1e-5, rtol=1e-5)

    print("KERNEL_OK")
</pallas_src>

<mosaic_0001>
module attributes {stable_mosaic.version = 11 : i64} {
  func.func @_lstm_head_kernel(%arg0: i32, %arg1: i32, %arg2: memref<8x8x16xf32, #tpu.memory_space<vmem>>, %arg3: memref<8x8x16xf32, #tpu.memory_space<vmem>>, %arg4: memref<16x128xf32, #tpu.memory_space<vmem>>, %arg5: memref<32x128xf32, #tpu.memory_space<vmem>>, %arg6: memref<1x128xf32, #tpu.memory_space<vmem>>, %arg7: memref<1x32xf32, #tpu.memory_space<vmem>>, %arg8: memref<1x1xf32, #tpu.memory_space<vmem>>, %arg9: memref<8x1xf32, #tpu.memory_space<vmem>>, %arg10: memref<2x8x8x128xf32, #tpu.memory_space<vmem>>, %arg11: memref<8x32xf32, #tpu.memory_space<vmem>>, %arg12: memref<8x32xf32, #tpu.memory_space<vmem>>) attributes {dimension_semantics = [#tpu.dimension_semantics<parallel>, #tpu.dimension_semantics<arbitrary>], iteration_bounds = array<i64: 1, 1>, scalar_prefetch = 0 : i64, scratch_operands = 3 : i64, tpu.core_type = #tpu.core_type<tc>, window_params = [{transform_indices = @transform_0, window_bounds = array<i64: 8, 8, 16>}, {transform_indices = @transform_1, window_bounds = array<i64: 8, 8, 16>}, {pipeline_mode = #tpu.pipeline_mode<synchronous>, transform_indices = @transform_2, window_bounds = array<i64: 16, 128>}, {pipeline_mode = #tpu.pipeline_mode<synchronous>, transform_indices = @transform_3, window_bounds = array<i64: 32, 128>}, {pipeline_mode = #tpu.pipeline_mode<synchronous>, transform_indices = @transform_4, window_bounds = array<i64: 1, 128>}, {pipeline_mode = #tpu.pipeline_mode<synchronous>, transform_indices = @transform_5, window_bounds = array<i64: 1, 32>}, {pipeline_mode = #tpu.pipeline_mode<synchronous>, transform_indices = @transform_6, window_bounds = array<i64: 1, 1>}, {transform_indices = @transform_7, window_bounds = array<i64: 8, 1>}]} {
    %c0_i32 = arith.constant 0 : i32
    %0 = arith.cmpi eq, %arg1, %c0_i32 : i32
    %1 = arith.extui %0 : i1 to i32
    %c0_i32_0 = arith.constant 0 : i32
    %2 = arith.cmpi ne, %1, %c0_i32_0 : i32
    scf.if %2 {
      %cst_51 = arith.constant 0.000000e+00 : f32
      %193 = vector.broadcast %cst_51 : f32 to vector<8x32xf32>
      %c0_52 = arith.constant 0 : index
      %c0_53 = arith.constant 0 : index
      %194 = vector.load %arg11[%c0_52, %c0_53] : memref<8x32xf32, #tpu.memory_space<vmem>>, vector<8x32xf32>
      tpu.vector_store %arg11[%c0_52, %c0_53], %193 {strides = array<i32>} : memref<8x32xf32, #tpu.memory_space<vmem>>, vector<8x32xf32>,
      %cst_54 = arith.constant 0.000000e+00 : f32
      %195 = vector.broadcast %cst_54 : f32 to vector<8x32xf32>
      %c0_55 = arith.constant 0 : index
      %c0_56 = arith.constant 0 : index
      %196 = vector.load %arg12[%c0_55, %c0_56] : memref<8x32xf32, #tpu.memory_space<vmem>>, vector<8x32xf32>
      tpu.vector_store %arg12[%c0_55, %c0_56], %195 {strides = array<i32>} : memref<8x32xf32, #tpu.memory_space<vmem>>, vector<8x32xf32>,
      %c0_57 = arith.constant 0 : index
      %c0_58 = arith.constant 0 : index
      %c0_59 = arith.constant 0 : index
      %197 = vector.load %arg2[%c0_57, %c0_58, %c0_59] : memref<8x8x16xf32, #tpu.memory_space<vmem>>, vector<8x8x16xf32>
      %198 = vector.shape_cast %197 : vector<8x8x16xf32> to vector<64x16xf32>
      %c0_60 = arith.constant 0 : index
      %c0_61 = arith.constant 0 : index
      %199 = vector.load %arg4[%c0_60, %c0_61] : memref<16x128xf32, #tpu.memory_space<vmem>>, vector<16x128xf32>
      %cst_62 = arith.constant dense<0.000000e+00> : vector<64x128xf32>
      %200 = tpu.matmul %198, %199, %cst_62 {dimension_numbers = #tpu.dot_dimension_numbers<[1], [0], [0], [1], [0, 0, 1, 1], [], []>} : vector<64x16xf32>, vector<16x128xf32>, vector<64x128xf32> -> vector<64x128xf32>
      %c0_63 = arith.constant 0 : index
      %c0_64 = arith.constant 0 : index
      %201 = vector.load %arg6[%c0_63, %c0_64] : memref<1x128xf32, #tpu.memory_space<vmem>>, vector<1x128xf32>
      %202 = vector.broadcast %201 : vector<1x128xf32> to vector<64x128xf32>
      %203 = arith.addf %200, %202 : vector<64x128xf32>
      %204 = vector.shape_cast %203 : vector<64x128xf32> to vector<8x8x128xf32>
      %c0_65 = arith.constant 0 : index
      %c0_66 = arith.constant 0 : index
      %c0_67 = arith.constant 0 : index
      %c0_68 = arith.constant 0 : index
      %205 = vector.load %arg10[%c0_65, %c0_66, %c0_67, %c0_68] : memref<2x8x8x128xf32, #tpu.memory_space<vmem>>, vector<1x8x8x128xf32>
      %206 = vector.shape_cast %205 : vector<1x8x8x128xf32> to vector<8x8x128xf32>
      %207 = vector.shape_cast %204 : vector<8x8x128xf32> to vector<1x8x8x128xf32>
      tpu.vector_store %arg10[%c0_65, %c0_66, %c0_67, %c0_68], %207 {strides = array<i32>} : memref<2x8x8x128xf32, #tpu.memory_space<vmem>>, vector<1x8x8x128xf32>,
    } else {
    }
    %c0 = arith.constant 0 : index
    %c0_1 = arith.constant 0 : index
    %3 = vector.load %arg5[%c0, %c0_1] : memref<32x128xf32, #tpu.memory_space<vmem>>, vector<32x128xf32>
    %c0_2 = arith.constant 0 : index
    %c0_3 = arith.constant 0 : index
    %4 = vector.load %arg11[%c0_2, %c0_3] : memref<8x32xf32, #tpu.memory_space<vmem>>, vector<8x32xf32>
    %c0_4 = arith.constant 0 : index
    %c0_5 = arith.constant 0 : index
    %5 = vector.load %arg12[%c0_4, %c0_5] : memref<8x32xf32, #tpu.memory_space<vmem>>, vector<8x32xf32>
    %c2_i32 = arith.constant 2 : i32
    %c0_i32_6 = arith.constant 0 : i32
    %6 = arith.cmpi eq, %c2_i32, %c0_i32_6 : i32
    %c1_i32 = arith.constant 1 : i32
    %7 = arith.select %6, %c1_i32, %c2_i32 : i32
    %8 = arith.remsi %arg1, %7 : i32
    %c0_i32_7 = arith.constant 0 : i32
    %9 = arith.cmpi ne, %8, %c0_i32_7 : i32
    %c0_i32_8 = arith.constant 0 : i32
    %10 = arith.cmpi slt, %8, %c0_i32_8 : i32
    %c0_i32_9 = arith.constant 0 : i32
    %11 = arith.cmpi slt, %7, %c0_i32_9 : i32
    %12 = arith.xori %10, %11 : i1
    %13 = arith.andi %12, %9 : i1
    %14 = arith.addi %8, %7 : i32
    %15 = arith.select %13, %14, %8 : i32
    %16 = arith.index_cast %15 : i32 to index
    %c0_10 = arith.constant 0 : index
    %c0_11 = arith.constant 0 : index
    %c0_12 = arith.constant 0 : index
    %17 = vector.load %arg10[%16, %c0_10, %c0_11, %c0_12] : memref<2x8x8x128xf32, #tpu.memory_space<vmem>>, vector<1x1x8x128xf32>
    %18 = vector.shape_cast %17 : vector<1x1x8x128xf32> to vector<8x128xf32>
    %cst = arith.constant dense<0.000000e+00> : vector<8x128xf32>
    %19 = tpu.matmul %4, %3, %cst {dimension_numbers = #tpu.dot_dimension_numbers<[1], [0], [0], [1], [0, 0, 1, 1], [], []>} : vector<8x32xf32>, vector<32x128xf32>, vector<8x128xf32> -> vector<8x128xf32>
    %20 = arith.addf %18, %19 : vector<8x128xf32>
    %21 = vector.extract_strided_slice %20 {offsets = [0, 0], sizes = [8, 96], strides = [1, 1]} : vector<8x128xf32> to vector<8x96xf32>
    %22 = arith.negf %21 : vector<8x96xf32>
    %23 = math.exp %22 : vector<8x96xf32>
    %cst_13 = arith.constant 1.000000e+00 : f32
    %24 = vector.broadcast %cst_13 : f32 to vector<8x96xf32>
    %25 = arith.addf %24, %23 : vector<8x96xf32>
    %26 = arith.divf %24, %25 : vector<8x96xf32>
    %27 = vector.extract_strided_slice %26 {offsets = [0, 0], sizes = [8, 32], strides = [1, 1]} : vector<8x96xf32> to vector<8x32xf32>
    %28 = vector.extract_strided_slice %26 {offsets = [0, 32], sizes = [8, 32], strides = [1, 1]} : vector<8x96xf32> to vector<8x32xf32>
    %29 = vector.extract_strided_slice %26 {offsets = [0, 64], sizes = [8, 32], strides = [1, 1]} : vector<8x96xf32> to vector<8x32xf32>
    %30 = vector.extract_strided_slice %20 {offsets = [0, 96], sizes = [8, 32], strides = [1, 1]} : vector<8x128xf32> to vector<8x32xf32>
    %31 = math.tanh %30 : vector<8x32xf32>
    %32 = arith.mulf %28, %5 : vector<8x32xf32>
    %33 = arith.mulf %27, %31 : vector<8x32xf32>
    %34 = arith.addf %32, %33 : vector<8x32xf32>
    %35 = math.tanh %34 : vector<8x32xf32>
    %36 = arith.mulf %29, %35 : vector<8x32xf32>
    %37 = arith.index_cast %15 : i32 to index
    %c1 = arith.constant 1 : index
    %c0_14 = arith.constant 0 : index
    %c0_15 = arith.constant 0 : index
    %38 = vector.load %arg10[%37, %c1, %c0_14, %c0_15] : memref<2x8x8x128xf32, #tpu.memory_space<vmem>>, vector<1x1x8x128xf32>
    %39 = vector.shape_cast %38 : vector<1x1x8x128xf32> to vector<8x128xf32>
    %cst_16 = arith.constant dense<0.000000e+00> : vector<8x128xf32>
    %40 = tpu.matmul %36, %3, %cst_16 {dimension_numbers = #tpu.dot_dimension_numbers<[1], [0], [0], [1], [0, 0, 1, 1], [], []>} : vector<8x32xf32>, vector<32x128xf32>, vector<8x128xf32> -> vector<8x128xf32>
    %41 = arith.addf %39, %40 : vector<8x128xf32>
    %42 = vector.extract_strided_slice %41 {offsets = [0, 0], sizes = [8, 96], strides = [1, 1]} : vector<8x128xf32> to vector<8x96xf32>
    %43 = arith.negf %42 : vector<8x96xf32>
    %44 = math.exp %43 : vector<8x96xf32>
    %cst_17 = arith.constant 1.000000e+00 : f32
    %45 = vector.broadcast %cst_17 : f32 to vector<8x96xf32>
    %46 = arith.addf %45, %44 : vector<8x96xf32>
    %47 = arith.divf %45, %46 : vector<8x96xf32>
    %48 = vector.extract_strided_slice %47 {offsets = [0, 0], sizes = [8, 32], strides = [1, 1]} : vector<8x96xf32> to vector<8x32xf32>
    %49 = vector.extract_strided_slice %47 {offsets = [0, 32], sizes = [8, 32], strides = [1, 1]} : vector<8x96xf32> to vector<8x32xf32>
    %50 = vector.extract_strided_slice %47 {offsets = [0, 64], sizes = [8, 32], strides = [1, 1]} : vector<8x96xf32> to vector<8x32xf32>
    %51 = vector.extract_strided_slice %41 {offsets = [0, 96], sizes = [8, 32], strides = [1, 1]} : vector<8x128xf32> to vector<8x32xf32>
    %52 = math.tanh %51 : vector<8x32xf32>
    %53 = arith.mulf %49, %34 : vector<8x32xf32>
    %54 = arith.mulf %48, %52 : vector<8x32xf32>
    %55 = arith.addf %53, %54 : vector<8x32xf32>
    %56 = math.tanh %55 : vector<8x32xf32>
    %57 = arith.mulf %50, %56 : vector<8x32xf32>
    %58 = arith.index_cast %15 : i32 to index
    %c2 = arith.constant 2 : index
    %c0_18 = arith.constant 0 : index
    %c0_19 = arith.constant 0 : index
    %59 = vector.load %arg10[%58, %c2, %c0_18, %c0_19] : memref<2x8x8x128xf32, #tpu.memory_space<vmem>>, vector<1x1x8x128xf32>
    %60 = vector.shape_cast %59 : vector<1x1x8x128xf32> to vector<8x128xf32>
    %cst_20 = arith.constant dense<0.000000e+00> : vector<8x128xf32>
    %61 = tpu.matmul %57, %3, %cst_20 {dimension_numbers = #tpu.dot_dimension_numbers<[1], [0], [0], [1], [0, 0, 1, 1], [], []>} : vector<8x32xf32>, vector<32x128xf32>, vector<8x128xf32> -> vector<8x128xf32>
    %62 = arith.addf %60, %61 : vector<8x128xf32>
    %63 = vector.extract_strided_slice %62 {offsets = [0, 0], sizes = [8, 96], strides = [1, 1]} : vector<8x128xf32> to vector<8x96xf32>
    %64 = arith.negf %63 : vector<8x96xf32>
    %65 = math.exp %64 : vector<8x96xf32>
    %cst_21 = arith.constant 1.000000e+00 : f32
    %66 = vector.broadcast %cst_21 : f32 to vector<8x96xf32>
    %67 = arith.addf %66, %65 : vector<8x96xf32>
    %68 = arith.divf %66, %67 : vector<8x96xf32>
    %69 = vector.extract_strided_slice %68 {offsets = [0, 0], sizes = [8, 32], strides = [1, 1]} : vector<8x96xf32> to vector<8x32xf32>
    %70 = vector.extract_strided_slice %68 {offsets = [0, 32], sizes = [8, 32], strides = [1, 1]} : vector<8x96xf32> to vector<8x32xf32>
    %71 = vector.extract_strided_slice %68 {offsets = [0, 64], sizes = [8, 32], strides = [1, 1]} : vector<8x96xf32> to vector<8x32xf32>
    %72 = vector.extract_strided_slice %62 {offsets = [0, 96], sizes = [8, 32], strides = [1, 1]} : vector<8x128xf32> to vector<8x32xf32>
    %73 = math.tanh %72 : vector<8x32xf32>
    %74 = arith.mulf %70, %55 : vector<8x32xf32>
    %75 = arith.mulf %69, %73 : vector<8x32xf32>
    %76 = arith.addf %74, %75 : vector<8x32xf32>
    %77 = math.tanh %76 : vector<8x32xf32>
    %78 = arith.mulf %71, %77 : vector<8x32xf32>
    %79 = arith.index_cast %15 : i32 to index
    %c3 = arith.constant 3 : index
    %c0_22 = arith.constant 0 : index
    %c0_23 = arith.constant 0 : index
    %80 = vector.load %arg10[%79, %c3, %c0_22, %c0_23] : memref<2x8x8x128xf32, #tpu.memory_space<vmem>>, vector<1x1x8x128xf32>
    %81 = vector.shape_cast %80 : vector<1x1x8x128xf32> to vector<8x128xf32>
    %cst_24 = arith.constant dense<0.000000e+00> : vector<8x128xf32>
    %82 = tpu.matmul %78, %3, %cst_24 {dimension_numbers = #tpu.dot_dimension_numbers<[1], [0], [0], [1], [0, 0, 1, 1], [], []>} : vector<8x32xf32>, vector<32x128xf32>, vector<8x128xf32> -> vector<8x128xf32>
    %83 = arith.addf %81, %82 : vector<8x128xf32>
    %84 = vector.extract_strided_slice %83 {offsets = [0, 0], sizes = [8, 96], strides = [1, 1]} : vector<8x128xf32> to vector<8x96xf32>
    %85 = arith.negf %84 : vector<8x96xf32>
    %86 = math.exp %85 : vector<8x96xf32>
    %cst_25 = arith.constant 1.000000e+00 : f32
    %87 = vector.broadcast %cst_25 : f32 to vector<8x96xf32>
    %88 = arith.addf %87, %86 : vector<8x96xf32>
    %89 = arith.divf %87, %88 : vector<8x96xf32>
    %90 = vector.extract_strided_slice %89 {offsets = [0, 0], sizes = [8, 32], strides = [1, 1]} : vector<8x96xf32> to vector<8x32xf32>
    %91 = vector.extract_strided_slice %89 {offsets = [0, 32], sizes = [8, 32], strides = [1, 1]} : vector<8x96xf32> to vector<8x32xf32>
    %92 = vector.extract_strided_slice %89 {offsets = [0, 64], sizes = [8, 32], strides = [1, 1]} : vector<8x96xf32> to vector<8x32xf32>
    %93 = vector.extract_strided_slice %83 {offsets = [0, 96], sizes = [8, 32], strides = [1, 1]} : vector<8x128xf32> to vector<8x32xf32>
    %94 = math.tanh %93 : vector<8x32xf32>
    %95 = arith.mulf %91, %76 : vector<8x32xf32>
    %96 = arith.mulf %90, %94 : vector<8x32xf32>
    %97 = arith.addf %95, %96 : vector<8x32xf32>
    %98 = math.tanh %97 : vector<8x32xf32>
    %99 = arith.mulf %92, %98 : vector<8x32xf32>
    %100 = arith.index_cast %15 : i32 to index
    %c4 = arith.constant 4 : index
    %c0_26 = arith.constant 0 : index
    %c0_27 = arith.constant 0 : index
    %101 = vector.load %arg10[%100, %c4, %c0_26, %c0_27] : memref<2x8x8x128xf32, #tpu.memory_space<vmem>>, vector<1x1x8x128xf32>
    %102 = vector.shape_cast %101 : vector<1x1x8x128xf32> to vector<8x128xf32>
    %cst_28 = arith.constant dense<0.000000e+00> : vector<8x128xf32>
    %103 = tpu.matmul %99, %3, %cst_28 {dimension_numbers = #tpu.dot_dimension_numbers<[1], [0], [0], [1], [0, 0, 1, 1], [], []>} : vector<8x32xf32>, vector<32x128xf32>, vector<8x128xf32> -> vector<8x128xf32>
    %104 = arith.addf %102, %103 : vector<8x128xf32>
    %105 = vector.extract_strided_slice %104 {offsets = [0, 0], sizes = [8, 96], strides = [1, 1]} : vector<8x128xf32> to vector<8x96xf32>
    %106 = arith.negf %105 : vector<8x96xf32>
    %107 = math.exp %106 : vector<8x96xf32>
    %cst_29 = arith.constant 1.000000e+00 : f32
    %108 = vector.broadcast %cst_29 : f32 to vector<8x96xf32>
    %109 = arith.addf %108, %107 : vector<8x96xf32>
    %110 = arith.divf %108, %109 : vector<8x96xf32>
    %111 = vector.extract_strided_slice %110 {offsets = [0, 0], sizes = [8, 32], strides = [1, 1]} : vector<8x96xf32> to vector<8x32xf32>
    %112 = vector.extract_strided_slice %110 {offsets = [0, 32], sizes = [8, 32], strides = [1, 1]} : vector<8x96xf32> to vector<8x32xf32>
    %113 = vector.extract_strided_slice %110 {offsets = [0, 64], sizes = [8, 32], strides = [1, 1]} : vector<8x96xf32> to vector<8x32xf32>
    %114 = vector.extract_strided_slice %104 {offsets = [0, 96], sizes = [8, 32], strides = [1, 1]} : vector<8x128xf32> to vector<8x32xf32>
    %115 = math.tanh %114 : vector<8x32xf32>
    %116 = arith.mulf %112, %97 : vector<8x32xf32>
    %117 = arith.mulf %111, %115 : vector<8x32xf32>
    %118 = arith.addf %116, %117 : vector<8x32xf32>
    %119 = math.tanh %118 : vector<8x32xf32>
    %120 = arith.mulf %113, %119 : vector<8x32xf32>
    %121 = arith.index_cast %15 : i32 to index
    %c5 = arith.constant 5 : index
    %c0_30 = arith.constant 0 : index
    %c0_31 = arith.constant 0 : index
    %122 = vector.load %arg10[%121, %c5, %c0_30, %c0_31] : memref<2x8x8x128xf32, #tpu.memory_space<vmem>>, vector<1x1x8x128xf32>
    %123 = vector.shape_cast %122 : vector<1x1x8x128xf32> to vector<8x128xf32>
    %cst_32 = arith.constant dense<0.000000e+00> : vector<8x128xf32>
    %124 = tpu.matmul %120, %3, %cst_32 {dimension_numbers = #tpu.dot_dimension_numbers<[1], [0], [0], [1], [0, 0, 1, 1], [], []>} : vector<8x32xf32>, vector<32x128xf32>, vector<8x128xf32> -> vector<8x128xf32>
    %125 = arith.addf %123, %124 : vector<8x128xf32>
    %126 = vector.extract_strided_slice %125 {offsets = [0, 0], sizes = [8, 96], strides = [1, 1]} : vector<8x128xf32> to vector<8x96xf32>
    %127 = arith.negf %126 : vector<8x96xf32>
    %128 = math.exp %127 : vector<8x96xf32>
    %cst_33 = arith.constant 1.000000e+00 : f32
    %129 = vector.broadcast %cst_33 : f32 to vector<8x96xf32>
    %130 = arith.addf %129, %128 : vector<8x96xf32>
    %131 = arith.divf %129, %130 : vector<8x96xf32>
    %132 = vector.extract_strided_slice %131 {offsets = [0, 0], sizes = [8, 32], strides = [1, 1]} : vector<8x96xf32> to vector<8x32xf32>
    %133 = vector.extract_strided_slice %131 {offsets = [0, 32], sizes = [8, 32], strides = [1, 1]} : vector<8x96xf32> to vector<8x32xf32>
    %134 = vector.extract_strided_slice %131 {offsets = [0, 64], sizes = [8, 32], strides = [1, 1]} : vector<8x96xf32> to vector<8x32xf32>
    %135 = vector.extract_strided_slice %125 {offsets = [0, 96], sizes = [8, 32], strides = [1, 1]} : vector<8x128xf32> to vector<8x32xf32>
    %136 = math.tanh %135 : vector<8x32xf32>
    %137 = arith.mulf %133, %118 : vector<8x32xf32>
    %138 = arith.mulf %132, %136 : vector<8x32xf32>
    %139 = arith.addf %137, %138 : vector<8x32xf32>
    %140 = math.tanh %139 : vector<8x32xf32>
    %141 = arith.mulf %134, %140 : vector<8x32xf32>
    %142 = arith.index_cast %15 : i32 to index
    %c6 = arith.constant 6 : index
    %c0_34 = arith.constant 0 : index
    %c0_35 = arith.constant 0 : index
    %143 = vector.load %arg10[%142, %c6, %c0_34, %c0_35] : memref<2x8x8x128xf32, #tpu.memory_space<vmem>>, vector<1x1x8x128xf32>
    %144 = vector.shape_cast %143 : vector<1x1x8x128xf32> to vector<8x128xf32>
    %cst_36 = arith.constant dense<0.000000e+00> : vector<8x128xf32>
    %145 = tpu.matmul %141, %3, %cst_36 {dimension_numbers = #tpu.dot_dimension_numbers<[1], [0], [0], [1], [0, 0, 1, 1], [], []>} : vector<8x32xf32>, vector<32x128xf32>, vector<8x128xf32> -> vector<8x128xf32>
    %146 = arith.addf %144, %145 : vector<8x128xf32>
    %147 = vector.extract_strided_slice %146 {offsets = [0, 0], sizes = [8, 96], strides = [1, 1]} : vector<8x128xf32> to vector<8x96xf32>
    %148 = arith.negf %147 : vector<8x96xf32>
    %149 = math.exp %148 : vector<8x96xf32>
    %cst_37 = arith.constant 1.000000e+00 : f32
    %150 = vector.broadcast %cst_37 : f32 to vector<8x96xf32>
    %151 = arith.addf %150, %149 : vector<8x96xf32>
    %152 = arith.divf %150, %151 : vector<8x96xf32>
    %153 = vector.extract_strided_slice %152 {offsets = [0, 0], sizes = [8, 32], strides = [1, 1]} : vector<8x96xf32> to vector<8x32xf32>
    %154 = vector.extract_strided_slice %152 {offsets = [0, 32], sizes = [8, 32], strides = [1, 1]} : vector<8x96xf32> to vector<8x32xf32>
    %155 = vector.extract_strided_slice %152 {offsets = [0, 64], sizes = [8, 32], strides = [1, 1]} : vector<8x96xf32> to vector<8x32xf32>
    %156 = vector.extract_strided_slice %146 {offsets = [0, 96], sizes = [8, 32], strides = [1, 1]} : vector<8x128xf32> to vector<8x32xf32>
    %157 = math.tanh %156 : vector<8x32xf32>
    %158 = arith.mulf %154, %139 : vector<8x32xf32>
    %159 = arith.mulf %153, %157 : vector<8x32xf32>
    %160 = arith.addf %158, %159 : vector<8x32xf32>
    %161 = math.tanh %160 : vector<8x32xf32>
    %162 = arith.mulf %155, %161 : vector<8x32xf32>
    %163 = arith.index_cast %15 : i32 to index
    %c7 = arith.constant 7 : index
    %c0_38 = arith.constant 0 : index
    %c0_39 = arith.constant 0 : index
    %164 = vector.load %arg10[%163, %c7, %c0_38, %c0_39] : memref<2x8x8x128xf32, #tpu.memory_space<vmem>>, vector<1x1x8x128xf32>
    %165 = vector.shape_cast %164 : vector<1x1x8x128xf32> to vector<8x128xf32>
    %cst_40 = arith.constant dense<0.000000e+00> : vector<8x128xf32>
    %166 = tpu.matmul %162, %3, %cst_40 {dimension_numbers = #tpu.dot_dimension_numbers<[1], [0], [0], [1], [0, 0, 1, 1], [], []>} : vector<8x32xf32>, vector<32x128xf32>, vector<8x128xf32> -> vector<8x128xf32>
    %167 = arith.addf %165, %166 : vector<8x128xf32>
    %168 = vector.extract_strided_slice %167 {offsets = [0, 0], sizes = [8, 96], strides = [1, 1]} : vector<8x128xf32> to vector<8x96xf32>
    %169 = arith.negf %168 : vector<8x96xf32>
    %170 = math.exp %169 : vector<8x96xf32>
    %cst_41 = arith.constant 1.000000e+00 : f32
    %171 = vector.broadcast %cst_41 : f32 to vector<8x96xf32>
    %172 = arith.addf %171, %170 : vector<8x96xf32>
    %173 = arith.divf %171, %172 : vector<8x96xf32>
    %174 = vector.extract_strided_slice %173 {offsets = [0, 0], sizes = [8, 32], strides = [1, 1]} : vector<8x96xf32> to vector<8x32xf32>
    %175 = vector.extract_strided_slice %173 {offsets = [0, 32], sizes = [8, 32], strides = [1, 1]} : vector<8x96xf32> to vector<8x32xf32>
    %176 = vector.extract_strided_slice %173 {offsets = [0, 64], sizes = [8, 32], strides = [1, 1]} : vector<8x96xf32> to vector<8x32xf32>
    %177 = vector.extract_strided_slice %167 {offsets = [0, 96], sizes = [8, 32], strides = [1, 1]} : vector<8x128xf32> to vector<8x32xf32>
    %178 = math.tanh %177 : vector<8x32xf32>
    %179 = arith.mulf %175, %160 : vector<8x32xf32>
    %180 = arith.mulf %174, %178 : vector<8x32xf32>
    %181 = arith.addf %179, %180 : vector<8x32xf32>
    %182 = math.tanh %181 : vector<8x32xf32>
    %183 = arith.mulf %176, %182 : vector<8x32xf32>
    %c0_42 = arith.constant 0 : index
    %c0_43 = arith.constant 0 : index
    %184 = vector.load %arg11[%c0_42, %c0_43] : memref<8x32xf32, #tpu.memory_space<vmem>>, vector<8x32xf32>
    tpu.vector_store %arg11[%c0_42, %c0_43], %183 {strides = array<i32>} : memref<8x32xf32, #tpu.memory_space<vmem>>, vector<8x32xf32>,
    %c0_44 = arith.constant 0 : index
    %c0_45 = arith.constant 0 : index
    %185 = vector.load %arg12[%c0_44, %c0_45] : memref<8x32xf32, #tpu.memory_space<vmem>>, vector<8x32xf32>
    tpu.vector_store %arg12[%c0_44, %c0_45], %181 {strides = array<i32>} : memref<8x32xf32, #tpu.memory_space<vmem>>, vector<8x32xf32>,
    %c1_i32_46 = arith.constant 1 : i32
    %186 = arith.addi %arg1, %c1_i32_46 : i32
    %c1_i32_47 = arith.constant 1 : i32
    %187 = arith.cmpi slt, %186, %c1_i32_47 : i32
    %188 = arith.extui %187 : i1 to i32
    %c0_i32_48 = arith.constant 0 : i32
    %189 = arith.cmpi ne, %188, %c0_i32_48 : i32
    scf.if %189 {
      %c0_51 = arith.constant 0 : index
      %c0_52 = arith.constant 0 : index
      %c0_53 = arith.constant 0 : index
      %193 = vector.load %arg3[%c0_51, %c0_52, %c0_53] : memref<8x8x16xf32, #tpu.memory_space<vmem>>, vector<8x8x16xf32>
      %194 = vector.shape_cast %193 : vector<8x8x16xf32> to vector<64x16xf32>
      %c0_54 = arith.constant 0 : index
      %c0_55 = arith.constant 0 : index
      %195 = vector.load %arg4[%c0_54, %c0_55] : memref<16x128xf32, #tpu.memory_space<vmem>>, vector<16x128xf32>
      %cst_56 = arith.constant dense<0.000000e+00> : vector<64x128xf32>
      %196 = tpu.matmul %194, %195, %cst_56 {dimension_numbers = #tpu.dot_dimension_numbers<[1], [0], [0], [1], [0, 0, 1, 1], [], []>} : vector<64x16xf32>, vector<16x128xf32>, vector<64x128xf32> -> vector<64x128xf32>
      %c0_57 = arith.constant 0 : index
      %c0_58 = arith.constant 0 : index
      %197 = vector.load %arg6[%c0_57, %c0_58] : memref<1x128xf32, #tpu.memory_space<vmem>>, vector<1x128xf32>
      %198 = vector.broadcast %197 : vector<1x128xf32> to vector<64x128xf32>
      %199 = arith.addf %196, %198 : vector<64x128xf32>
      %200 = vector.shape_cast %199 : vector<64x128xf32> to vector<8x8x128xf32>
      %c1_i32_59 = arith.constant 1 : i32
      %201 = arith.addi %arg1, %c1_i32_59 : i32
      %c2_i32_60 = arith.constant 2 : i32
      %c0_i32_61 = arith.constant 0 : i32
      %202 = arith.cmpi eq, %c2_i32_60, %c0_i32_61 : i32
      %c1_i32_62 = arith.constant 1 : i32
      %203 = arith.select %202, %c1_i32_62, %c2_i32_60 : i32
      %204 = arith.remsi %201, %203 : i32
      %c0_i32_63 = arith.constant 0 : i32
      %205 = arith.cmpi ne, %204, %c0_i32_63 : i32
      %c0_i32_64 = arith.constant 0 : i32
      %206 = arith.cmpi slt, %204, %c0_i32_64 : i32
      %c0_i32_65 = arith.constant 0 : i32
      %207 = arith.cmpi slt, %203, %c0_i32_65 : i32
      %208 = arith.xori %206, %207 : i1
      %209 = arith.andi %208, %205 : i1
      %210 = arith.addi %204, %203 : i32
      %211 = arith.select %209, %210, %204 : i32
      %212 = arith.index_cast %211 : i32 to index
      %c0_66 = arith.constant 0 : index
      %c0_67 = arith.constant 0 : index
      %c0_68 = arith.constant 0 : index
      %213 = vector.load %arg10[%212, %c0_66, %c0_67, %c0_68] : memref<2x8x8x128xf32, #tpu.memory_space<vmem>>, vector<1x8x8x128xf32>
      %214 = vector.shape_cast %213 : vector<1x8x8x128xf32> to vector<8x8x128xf32>
      %215 = vector.shape_cast %200 : vector<8x8x128xf32> to vector<1x8x8x128xf32>
      tpu.vector_store %arg10[%212, %c0_66, %c0_67, %c0_68], %215 {strides = array<i32>} : memref<2x8x8x128xf32, #tpu.memory_space<vmem>>, vector<1x8x8x128xf32>,
    } else {
    }
    %c0_i32_49 = arith.constant 0 : i32
    %190 = arith.cmpi eq, %arg1, %c0_i32_49 : i32
    %191 = arith.extui %190 : i1 to i32
    %c0_i32_50 = arith.constant 0 : i32
    %192 = arith.cmpi ne, %191, %c0_i32_50 : i32
    scf.if %192 {
      %c0_51 = arith.constant 0 : index
      %c0_52 = arith.constant 0 : index
      %193 = vector.load %arg7[%c0_51, %c0_52] : memref<1x32xf32, #tpu.memory_space<vmem>>, vector<1x32xf32>
      %194 = vector.broadcast %193 : vector<1x32xf32> to vector<8x32xf32>
      %195 = arith.mulf %183, %194 : vector<8x32xf32>
      %cst_53 = arith.constant dense<0.000000e+00> : vector<8xf32>
      %196 = vector.multi_reduction <add>, %195, %cst_53 [1] : vector<8x32xf32> to vector<8xf32>
      %197 = vector.shape_cast %196 : vector<8xf32> to vector<8x1xf32>
      %c0_54 = arith.constant 0 : index
      %c0_55 = arith.constant 0 : index
      %198 = vector.load %arg8[%c0_54, %c0_55] : memref<1x1xf32, #tpu.memory_space<vmem>>, vector<1x1xf32>
      %199 = vector.broadcast %198 : vector<1x1xf32> to vector<8x1xf32>
      %200 = arith.addf %197, %199 : vector<8x1xf32>
      %201 = arith.negf %200 : vector<8x1xf32>
      %202 = math.exp %201 : vector<8x1xf32>
      %cst_56 = arith.constant 1.000000e+00 : f32
      %203 = vector.broadcast %cst_56 : f32 to vector<8x1xf32>
      %204 = arith.addf %203, %202 : vector<8x1xf32>
      %205 = arith.divf %203, %204 : vector<8x1xf32>
      %c0_57 = arith.constant 0 : index
      %c0_58 = arith.constant 0 : index
      %206 = vector.load %arg9[%c0_57, %c0_58] : memref<8x1xf32, #tpu.memory_space<vmem>>, vector<8x1xf32>
      tpu.vector_store %arg9[%c0_57, %c0_58], %205 {strides = array<i32>} : memref<8x1xf32, #tpu.memory_space<vmem>>, vector<8x1xf32>,
    } else {
    }
    return
  }
  func.func @transform_0(%arg0: i32, %arg1: i32) -> (i32, i32, i32) {
    %c0_i32 = arith.constant 0 : i32
    %c0_i32_0 = arith.constant 0 : i32
    %c0_i32_1 = arith.constant 0 : i32
    return %c0_i32, %arg0, %c0_i32_0 : i32, i32, i32
  }
  func.func @transform_1(%arg0: i32, %arg1: i32) -> (i32, i32, i32) {
    %c1_i32 = arith.constant 1 : i32
    %0 = arith.addi %arg1, %c1_i32 : i32
    %c0_i32 = arith.constant 0 : i32
    %1 = arith.minsi %0, %c0_i32 : i32
    %c0_i32_0 = arith.constant 0 : i32
    %c0_i32_1 = arith.constant 0 : i32
    return %1, %arg0, %c0_i32_0 : i32, i32, i32
  }
  func.func @transform_2(%arg0: i32, %arg1: i32) -> (i32, i32) {
    %c0_i32 = arith.constant 0 : i32
    %c0_i32_0 = arith.constant 0 : i32
    %c0_i32_1 = arith.constant 0 : i32
    return %c0_i32, %c0_i32_0 : i32, i32
  }
  func.func @transform_3(%arg0: i32, %arg1: i32) -> (i32, i32) {
    %c0_i32 = arith.constant 0 : i32
    %c0_i32_0 = arith.constant 0 : i32
    %c0_i32_1 = arith.constant 0 : i32
    return %c0_i32, %c0_i32_0 : i32, i32
  }
  func.func @transform_4(%arg0: i32, %arg1: i32) -> (i32, i32) {
    %c0_i32 = arith.constant 0 : i32
    %c0_i32_0 = arith.constant 0 : i32
    %c0_i32_1 = arith.constant 0 : i32
    return %c0_i32, %c0_i32_0 : i32, i32
  }
  func.func @transform_5(%arg0: i32, %arg1: i32) -> (i32, i32) {
    %c0_i32 = arith.constant 0 : i32
    %c0_i32_0 = arith.constant 0 : i32
    %c0_i32_1 = arith.constant 0 : i32
    return %c0_i32, %c0_i32_0 : i32, i32
  }
  func.func @transform_6(%arg0: i32, %arg1: i32) -> (i32, i32) {
    %c0_i32 = arith.constant 0 : i32
    %c0_i32_0 = arith.constant 0 : i32
    %c0_i32_1 = arith.constant 0 : i32
    return %c0_i32, %c0_i32_0 : i32, i32
  }
  func.func @transform_7(%arg0: i32, %arg1: i32) -> (i32, i32) {
    %c0_i32 = arith.constant 0 : i32
    %c0_i32_0 = arith.constant 0 : i32
    return %arg0, %c0_i32 : i32, i32
  }
}

</mosaic_0001>

<llo_original>
// kernel: tpu_custom_call.1
$region0: #{tpu_custom_call.1}
  #allocation0 [shape = 'u32[]', space=smem, size = 0x4, offset = 0x4, fixed_abs, tag = 'smem constant byte address 0x4 - core index']
  #allocation1 [shape = 'u32[144,128]{1,0:T(1,128)}', space=vmem, size = 0x12000, scoped, tag = 'internal scratch']
  #allocation2 [shape = 'f32[2,8,8,128]{3,2,1,0:T(8,128)}', space=vmem, size = 0x10000, scoped, tag = 'scratch operand']
  #allocation3 [shape = 'f32[8,32]{1,0:T(8,128)}', space=vmem, size = 0x1000, scoped, tag = 'scratch operand']
  #allocation4 [shape = 'f32[8,32]{1,0:T(8,128)}', space=vmem, size = 0x1000, scoped, tag = 'scratch operand']
  #allocation5 [shape = 'f32[1,1]{1,0:T(1,128)S(1)}', space=vmem, size = 0x200, scoped, tag = 'scoped memory for tpu_custom_call.1']
  %s0 = inlined_call_operand.hbm [shape: f32[8,8,16], index: 0, kind: input, shape index: {}]
  %s1 = inlined_call_operand.hbm [shape: f32[8,8,16], index: 1, kind: input, shape index: {}]
  %s2 = inlined_call_operand.hbm [shape: f32[16,128], index: 2, kind: input, shape index: {}]
  %s3 = inlined_call_operand.hbm [shape: f32[32,128], index: 3, kind: input, shape index: {}]
  %s4 = inlined_call_operand.vmem [shape: f32[1,128], index: 4, kind: input, shape index: {}]
  %s5 = inlined_call_operand.vmem [shape: f32[1,32], index: 5, kind: input, shape index: {}]
  %s6 = inlined_call_operand.<no memory space> [shape: f32[1,1], index: 6, kind: input, shape index: {}]
  %s7 = inlined_call_operand.vmem [shape: f32[8,1], index: 7, kind: output, shape index: {}]
  %s8 = sld [smem:[#allocation0]]
  $region66: #{tpu_custom_call.1} parent=0
    _
  %s10 = ssub.s32 1, %s8
  %s11 = scalar_select 0, %s10, %s8
  %v12 = vstv %s6
  %13 = vst [vmem:[#allocation5] sm:$0x1] %v12
  $region1: #{tpu_custom_call.1} parent=0
    #allocation6 [shape = 'u8[32768]{0}', space=vmem, size = 0x8000, scoped, tag = 'input window, operand 0, single buffered']
    #allocation7 [shape = 's32[1]{0}', space=sflag, size = 0x4, scoped, tag = 'scoped memory for tpu_custom_call.1']
    #allocation8 [shape = 'u8[32768]{0}', space=vmem, size = 0x8000, scoped, tag = 'input window, operand 1, single buffered']
    #allocation9 [shape = 's32[1]{0}', space=sflag, size = 0x4, scoped, tag = 'scoped memory for tpu_custom_call.1']
    #allocation10 [shape = 'u8[8192]{0}', space=vmem, size = 0x2000, scoped, tag = 'input window, operand 2, single buffered']
    #allocation11 [shape = 'u8[16384]{0}', space=vmem, size = 0x4000, scoped, tag = 'input window, operand 3, single buffered']
    #allocation12 [shape = 's32[1]{0}', space=sflag, size = 0x4, scoped, tag = 'scoped memory for tpu_custom_call.1']
    %14 = vsyncpa [#allocation7], 0
    %15 = vsyncpa [#allocation9], 0
    %16 = vsyncpa [#allocation12], 0
    // Predicated region
    $region2: #{tpu_custom_call.1} parent=1 // pred_check
      _
    $region3: #{tpu_custom_call.1} parent=1 // pred_check_branch
      %18 = sbr.rel (0) target = $region5
    $region4: #{tpu_custom_call.1} parent=1 // pred_region
      %s20 = ssub.s32 1024, 1024
      %21 = vsyncadd [#allocation7], %s20
      %s22 = sshll.u32 [#allocation6], 4
      %s23 = int_to_ptr.vmem [resolvable:$true] %s22
      %28 = dma.hbm_to_vmem [thread:$0]  %s0, 1024, %s23, [#allocation7], 128, 128, 8
    $region5: #{tpu_custom_call.1} parent=1 // pred_fallthru
      _
    // Predicated region
    $region6: #{tpu_custom_call.1} parent=1 // pred_check
      _
    $region7: #{tpu_custom_call.1} parent=1 // pred_check_branch
      %30 = sbr.rel (0) target = $region9
    $region8: #{tpu_custom_call.1} parent=1 // pred_region
      %s31 = sadd.s32 0, 1
      %p32 = scmp.lt.s32.totalorder %s31, 0
      %s33 = scalar_select %p32, %s31, 0
      %s34 = smul.u32 8, %s33
      %s36 = ssub.s32 1024, 1024
      %37 = vsyncadd [#allocation9], %s36
      %s38 = smul.addr %s34, 128
      %s39 = scalar_lea.hbm %s1, %s38
      %s40 = sshll.u32 [#allocation8], 4
      %s41 = int_to_ptr.vmem [resolvable:$true] %s40
      %46 = dma.hbm_to_vmem [thread:$0]  %s39, 1024, %s41, [#allocation9], 128, 128, 8
    $region9: #{tpu_custom_call.1} parent=1 // pred_fallthru
      _
    // Predicated region
    $region10: #{tpu_custom_call.1} parent=1 // pred_check
      _
    $region11: #{tpu_custom_call.1} parent=1 // pred_check_branch
      %48 = sbr.rel (0) target = $region13
    $region12: #{tpu_custom_call.1} parent=1 // pred_region
      %s50 = ssub.s32 256, 256
      %51 = vsyncadd [#allocation9], %s50
      %s52 = sshll.u32 [#allocation10], 4
      %s53 = int_to_ptr.vmem [resolvable:$true] %s52
      %58 = dma.hbm_to_vmem [thread:$0]  %s2, 256, %s53, [#allocation9], 128, 128, 8
    $region13: #{tpu_custom_call.1} parent=1 // pred_fallthru
      _
    // Predicated region
    $region14: #{tpu_custom_call.1} parent=1 // pred_check
      _
    $region15: #{tpu_custom_call.1} parent=1 // pred_check_branch
      %60 = sbr.rel (0) target = $region17
    $region16: #{tpu_custom_call.1} parent=1 // pred_region
      %s62 = ssub.s32 512, 512
      %63 = vsyncadd [#allocation12], %s62
      %s64 = sshll.u32 [#allocation11], 4
      %s65 = int_to_ptr.vmem [resolvable:$true] %s64
      %70 = dma.hbm_to_vmem [thread:$0]  %s3, 512, %s65, [#allocation12], 128, 128, 8
    $region17: #{tpu_custom_call.1} parent=1 // pred_fallthru
      _
    // Predicated region
    $region18: #{tpu_custom_call.1} parent=1 // pred_check
      _
    $region19: #{tpu_custom_call.1} parent=1 // pred_check_branch
      %72 = sbr.rel (0) target = $region21
    $region20: #{tpu_custom_call.1} parent=1 // pred_region
      _
    $region21: #{tpu_custom_call.1} parent=1 // pred_fallthru
      _
    // Predicated region
    $region22: #{tpu_custom_call.1} parent=1 // pred_check
      _
    $region23: #{tpu_custom_call.1} parent=1 // pred_check_branch
      %74 = sbr.rel (0) target = $region25
    $region24: #{tpu_custom_call.1} parent=1 // pred_region
      _
    $region25: #{tpu_custom_call.1} parent=1 // pred_fallthru
      _
    // Predicated region
    $region26: #{tpu_custom_call.1} parent=1 // pred_check
      _
    $region27: #{tpu_custom_call.1} parent=1 // pred_check_branch
      %76 = sbr.rel (0) target = $region29
    $region28: #{tpu_custom_call.1} parent=1 // pred_region
      _
    $region29: #{tpu_custom_call.1} parent=1 // pred_fallthru
      _
    // Predicated region
    $region30: #{tpu_custom_call.1} parent=1 // pred_check
      _
    $region31: #{tpu_custom_call.1} parent=1 // pred_check_branch
      %78 = sbr.rel (0) target = $region33
    $region32: #{tpu_custom_call.1} parent=1 // pred_region
      %79 = dma.done [#allocation7], 1024
    $region33: #{tpu_custom_call.1} parent=1 // pred_fallthru
      _
    // Predicated region
    $region34: #{tpu_custom_call.1} parent=1 // pred_check
      _
    $region35: #{tpu_custom_call.1} parent=1 // pred_check_branch
      %81 = sbr.rel (0) target = $region37
    $region36: #{tpu_custom_call.1} parent=1 // pred_region
      %82 = dma.done [#allocation9], 1024
    $region37: #{tpu_custom_call.1} parent=1 // pred_fallthru
      _
    // Predicated region
    $region38: #{tpu_custom_call.1} parent=1 // pred_check
      _
    $region39: #{tpu_custom_call.1} parent=1 // pred_check_branch
      %84 = sbr.rel (0) target = $region41
    $region40: #{tpu_custom_call.1} parent=1 // pred_region
      %85 = dma.done [#allocation9], 256
    $region41: #{tpu_custom_call.1} parent=1 // pred_fallthru
      _
    // Predicated region
    $region42: #{tpu_custom_call.1} parent=1 // pred_check
      _
    $region43: #{tpu_custom_call.1} parent=1 // pred_check_branch
      %87 = sbr.rel (0) target = $region45
    $region44: #{tpu_custom_call.1} parent=1 // pred_region
      %88 = dma.done [#allocation12], 512
    $region45: #{tpu_custom_call.1} parent=1 // pred_fallthru
      _
    %s89 = sadd.s32 0, 1
    %p90 = scmp.lt.s32.totalorder %s89, 0
    %s91 = scalar_select %p90, %s89, 0
    %s92 = smul.u32 8, %s91
    %p93 = scmp.eq.s32.totalorder 0, 0
    // Predicated region
    $region46: #{tpu_custom_call.1} parent=1 // pred_check
      %p94 = pneg %p93
    $region47: #{tpu_custom_call.1} parent=1 // pred_check_branch
      %96 = sbr.rel (%p94) target = $region49
    $region48: #{tpu_custom_call.1} parent=1 // pred_region
      %vm97 = vcmask 261120
      %98 = vst.msk [vmem:[#allocation3] sm:$0xff] %vm97, 0.0
      %99 = vst.msk [vmem:[#allocation4] sm:$0xff] %vm97, 0.0
      %v100 = vld [vmem:[#allocation6] sm:$0xff]
      %v101 = vld [vmem:[#allocation6 + $0x8] sm:$0xff]
      %v102 = vld [vmem:[#allocation6 + $0x10] sm:$0xff]
      %v103 = vld [vmem:[#allocation6 + $0x18] sm:$0xff]
      %v104 = vld [vmem:[#allocation6 + $0x20] sm:$0xff]
      %v105 = vld [vmem:[#allocation6 + $0x28] sm:$0xff]
      %v106 = vld [vmem:[#allocation6 + $0x30] sm:$0xff]
      %v107 = vld [vmem:[#allocation6 + $0x38] sm:$0xff]
      %v108 = vld [vmem:[#allocation10] sm:$0xff]
      %v109 = vld [vmem:[#allocation10 + $0x8] sm:$0xff]
      %v110 = vld [vmem:[%s4] sm:$0x1]
      %v112 = vlaneseq
      %v113 = vshrl.u32 %v112, 7
      %v114 = vsub.s32 0, %v113
      %v115 = vrot.slane %v110, %v114
      %vm117 = vcmask 130048
      %v119 = vsel %vm117, %v100, 0
      %v122 = vsel %vm117, %v101, 0
      %v125 = vsel %vm117, %v102, 0
      %v128 = vsel %vm117, %v103, 0
      %v131 = vsel %vm117, %v104, 0
      %v134 = vsel %vm117, %v105, 0
      %v137 = vsel %vm117, %v106, 0
      %v140 = vsel %vm117, %v107, 0
      %142 = vmatprep.subr.mxu0 0.0
      %143 = vmatpush1.msra.mxu0 %v108
      %144 = vmatprep.subr.mxu0 0.0
      %145 = vmatpush1.msra.mxu0 %v109
      %146 = vmatprep.subr.mxu0 0.0
      %147 = vmatpush1.msra.mxu0 0.0
      %148 = vmatprep.subr.mxu0 0.0
      %149 = vmatpush1.msra.mxu0 0.0
      %150 = vmatprep.subr.mxu0 0.0
      %151 = vmatpush1.msra.mxu0 0.0
      %152 = vmatprep.subr.mxu0 0.0
      %153 = vmatpush1.msra.mxu0 0.0
      %154 = vmatprep.subr.mxu0 0.0
      %155 = vmatpush1.msra.mxu0 0.0
      %156 = vmatprep.subr.mxu0 0.0
      %157 = vmatpush1.msra.mxu0 0.0
      %158 = vmatprep.subr.mxu0 0.0
      %159 = vmatpush1.msra.mxu0 0.0
      %160 = vmatprep.subr.mxu0 0.0
      %161 = vmatpush1.msra.mxu0 0.0
      %162 = vmatprep.subr.mxu0 0.0
      %163 = vmatpush1.msra.mxu0 0.0
      %164 = vmatprep.subr.mxu0 0.0
      %165 = vmatpush1.msra.mxu0 0.0
      %166 = vmatprep.subr.mxu0 0.0
      %167 = vmatpush1.msra.mxu0 0.0
      %168 = vmatprep.subr.mxu0 0.0
      %169 = vmatpush1.msra.mxu0 0.0
      %170 = vmatprep.subr.mxu0 0.0
      %171 = vmatpush1.msra.mxu0 0.0
      %172 = vmatprep.subr.mxu0 0.0
      %173 = vmatpush1.msra.mxu0 0.0
      %174 = vmatprep.subr.mxu0 0.0
      %175 = vmatpush1.msra.mxu0 0.0
      %176 = vmatprep.subr.mxu0 0.0
      %177 = vmatpush1.msra.mxu0 0.0
      %178 = vmatprep.subr.mxu0 0.0
      %179 = vmatpush1.msra.mxu0 0.0
      %180 = vmatprep.subr.mxu0 0.0
      %181 = vmatpush1.msra.mxu0 0.0
      %182 = vmatprep.subr.mxu0 0.0
      %183 = vmatpush1.msra.mxu0 0.0
      %184 = vmatprep.subr.mxu0 0.0
      %185 = vmatpush1.msra.mxu0 0.0
      %186 = vmatprep.subr.mxu0 0.0
      %187 = vmatpush1.msra.mxu0 0.0
      %188 = vmatprep.subr.mxu0 0.0
      %189 = vmatpush1.msra.mxu0 0.0
      %190 = vmatprep.subr.mxu0 0.0
      %191 = vmatpush1.msra.mxu0 0.0
      %192 = vmatprep.subr.mxu0 0.0
      %193 = vmatpush1.msra.mxu0 0.0
      %194 = vmatprep.subr.mxu0 0.0
      %195 = vmatpush1.msra.mxu0 0.0
      %196 = vmatprep.subr.mxu0 0.0
      %197 = vmatpush1.msra.mxu0 0.0
      %198 = vmatprep.subr.mxu0 0.0
      %199 = vmatpush1.msra.mxu0 0.0
      %200 = vmatprep.subr.mxu0 0.0
      %201 = vmatpush1.msra.mxu0 0.0
      %202 = vmatprep.subr.mxu0 0.0
      %203 = vmatpush1.msra.mxu0 0.0
      %204 = vmatprep.subr.mxu0 0.0
      %205 = vmatpush1.msra.mxu0 0.0
      %206 = vmatprep.mubr.f32.mxu0 0.0
      %207 = vmatmul.mubr.f32.gmra.mrb[0].mxu0 %v119
      %v208 = vpop.f32.mrb[0].mxu0
      %v209 = vadd.f32 %v115, %v208
      %v210 = vpop.f32.mrb[0].mxu0
      %211 = vmatprep.mubr.f32.mxu0 0.0
      %212 = vmatmul.mubr.f32.gmra.mrb[0].mxu0 %v122
      %v213 = vpop.f32.mrb[0].mxu0
      %v214 = vadd.f32 %v115, %v213
      %v215 = vpop.f32.mrb[0].mxu0
      %216 = vmatprep.mubr.f32.mxu0 0.0
      %217 = vmatmul.mubr.f32.gmra.mrb[0].mxu0 %v125
      %v218 = vpop.f32.mrb[0].mxu0
      %v219 = vadd.f32 %v115, %v218
      %v220 = vpop.f32.mrb[0].mxu0
      %221 = vmatprep.mubr.f32.mxu0 0.0
      %222 = vmatmul.mubr.f32.gmra.mrb[0].mxu0 %v128
      %v223 = vpop.f32.mrb[0].mxu0
      %v224 = vadd.f32 %v115, %v223
      %v225 = vpop.f32.mrb[0].mxu0
      %226 = vmatprep.mubr.f32.mxu0 0.0
      %227 = vmatmul.mubr.f32.gmra.mrb[0].mxu0 %v131
      %v228 = vpop.f32.mrb[0].mxu0
      %v229 = vadd.f32 %v115, %v228
      %v230 = vpop.f32.mrb[0].mxu0
      %231 = vmatprep.mubr.f32.mxu0 0.0
      %232 = vmatmul.mubr.f32.gmra.mrb[0].mxu0 %v134
      %v233 = vpop.f32.mrb[0].mxu0
      %v234 = vadd.f32 %v115, %v233
      %v235 = vpop.f32.mrb[0].mxu0
      %236 = vmatprep.mubr.f32.mxu0 0.0
      %237 = vmatmul.mubr.f32.gmra.mrb[0].mxu0 %v137
      %v238 = vpop.f32.mrb[0].mxu0
      %v239 = vadd.f32 %v115, %v238
      %v240 = vpop.f32.mrb[0].mxu0
      %241 = vmatprep.mubr.f32.mxu0 0.0
      %242 = vmatmul.mubr.f32.gmra.mrb[0].mxu0 %v140
      %v243 = vpop.f32.mrb[0].mxu0
      %v244 = vadd.f32 %v115, %v243
      %v245 = vpop.f32.mrb[0].mxu0
      %246 = vdwg.mxu0
      %247 = vst [vmem:[#allocation2] sm:$0xff] %v209
      %248 = vst [vmem:[#allocation2 + $0x8] sm:$0xff] %v214
      %249 = vst [vmem:[#allocation2 + $0x10] sm:$0xff] %v219
      %250 = vst [vmem:[#allocation2 + $0x18] sm:$0xff] %v224
      %251 = vst [vmem:[#allocation2 + $0x20] sm:$0xff] %v229
      %252 = vst [vmem:[#allocation2 + $0x28] sm:$0xff] %v234
      %253 = vst [vmem:[#allocation2 + $0x30] sm:$0xff] %v239
      %254 = vst [vmem:[#allocation2 + $0x38] sm:$0xff] %v244
    $region49: #{tpu_custom_call.1} parent=1 // pred_fallthru
      _
    %v255 = vld [vmem:[#allocation11] sm:$0xff]
    %v256 = vld [vmem:[#allocation11 + $0x8] sm:$0xff]
    %v257 = vld [vmem:[#allocation11 + $0x10] sm:$0xff]
    %v258 = vld [vmem:[#allocation11 + $0x18] sm:$0xff]
    %v259 = vld [vmem:[#allocation3] sm:$0xff]
    %v260 = vld [vmem:[#allocation4] sm:$0xff]
    %s261 = ssub.s32 0, 0
    %s262 = ssub.s32 0, 0
    %p263 = scmp.ne.s32.totalorder 0, 0
    %p264 = scmp.lt.s32.totalorder 0, 0
    %p265 = pnand %p264, %p263
    %p266 = pneg %p265
    %s267 = sadd.s32 0, 2
    %s268 = scalar_select %p266, %s267, 0
    %s269 = smul.u32 %s268, 64
    %s270 = scalar_lea.vmem [#allocation2], %s269
    %v271 = vld [vmem:[%s270] sm:$0xff]
    %vm272 = vcmask 261120
    %v274 = vsel %vm272, %v259, 0
    %276 = vmatprep.subr.mxu0 0.0
    %277 = vmatpush1.msra.mxu0 %v255
    %278 = vmatprep.subr.mxu0 0.0
    %279 = vmatpush1.msra.mxu0 %v256
    %280 = vmatprep.subr.mxu0 0.0
    %281 = vmatpush1.msra.mxu0 %v257
    %282 = vmatprep.subr.mxu0 0.0
    %283 = vmatpush1.msra.mxu0 %v258
    %284 = vmatprep.subr.mxu0 0.0
    %285 = vmatpush1.msra.mxu0 0.0
    %286 = vmatprep.subr.mxu0 0.0
    %287 = vmatpush1.msra.mxu0 0.0
    %288 = vmatprep.subr.mxu0 0.0
    %289 = vmatpush1.msra.mxu0 0.0
    %290 = vmatprep.subr.mxu0 0.0
    %291 = vmatpush1.msra.mxu0 0.0
    %292 = vmatprep.subr.mxu0 0.0
    %293 = vmatpush1.msra.mxu0 0.0
    %294 = vmatprep.subr.mxu0 0.0
    %295 = vmatpush1.msra.mxu0 0.0
    %296 = vmatprep.subr.mxu0 0.0
    %297 = vmatpush1.msra.mxu0 0.0
    %298 = vmatprep.subr.mxu0 0.0
    %299 = vmatpush1.msra.mxu0 0.0
    %300 = vmatprep.subr.mxu0 0.0
    %301 = vmatpush1.msra.mxu0 0.0
    %302 = vmatprep.subr.mxu0 0.0
    %303 = vmatpush1.msra.mxu0 0.0
    %304 = vmatprep.subr.mxu0 0.0
    %305 = vmatpush1.msra.mxu0 0.0
    %306 = vmatprep.subr.mxu0 0.0
    %307 = vmatpush1.msra.mxu0 0.0
    %308 = vmatprep.subr.mxu0 0.0
    %309 = vmatpush1.msra.mxu0 0.0
    %310 = vmatprep.subr.mxu0 0.0
    %311 = vmatpush1.msra.mxu0 0.0
    %312 = vmatprep.subr.mxu0 0.0
    %313 = vmatpush1.msra.mxu0 0.0
    %314 = vmatprep.subr.mxu0 0.0
    %315 = vmatpush1.msra.mxu0 0.0
    %316 = vmatprep.subr.mxu0 0.0
    %317 = vmatpush1.msra.mxu0 0.0
    %318 = vmatprep.subr.mxu0 0.0
    %319 = vmatpush1.msra.mxu0 0.0
    %320 = vmatprep.subr.mxu0 0.0
    %321 = vmatpush1.msra.mxu0 0.0
    %322 = vmatprep.subr.mxu0 0.0
    %323 = vmatpush1.msra.mxu0 0.0
    %324 = vmatprep.subr.mxu0 0.0
    %325 = vmatpush1.msra.mxu0 0.0
    %326 = vmatprep.subr.mxu0 0.0
    %327 = vmatpush1.msra.mxu0 0.0
    %328 = vmatprep.subr.mxu0 0.0
    %329 = vmatpush1.msra.mxu0 0.0
    %330 = vmatprep.subr.mxu0 0.0
    %331 = vmatpush1.msra.mxu0 0.0
    %332 = vmatprep.subr.mxu0 0.0
    %333 = vmatpush1.msra.mxu0 0.0
    %334 = vmatprep.subr.mxu0 0.0
    %335 = vmatpush1.msra.mxu0 0.0
    %336 = vmatprep.subr.mxu0 0.0
    %337 = vmatpush1.msra.mxu0 0.0
    %338 = vmatprep.subr.mxu0 0.0
    %339 = vmatpush1.msra.mxu0 0.0
    %340 = vmatprep.mubr.f32.mxu0 0.0
    %341 = vmatmul.mubr.f32.gmra.mrb[0].mxu0 %v274
    %v342 = vpop.f32.mrb[0].mxu0
    %v343 = vadd.f32 0.0, %v342
    %v344 = vpop.f32.mrb[0].mxu0
    %345 = vdwg.mxu0
    %v346 = vadd.f32 %v271, %v343
    %v347 = vxor.u32 %v346, 2147483648
    %v348 = vmul.f32 %v347, 1.442695
    %v349 = vpow.pop %v348
    %v350 = vadd.f32 %v349, 1.0
    %v351 = vrcp.pop %v350
    %v352 = vmul.f32 1.0, %v351
    %v353 = vtanh.pop %v346
    %355 = vrot.lane.b32.xlu0 %v260, 32
    %v356 = vpop.permute.xlu0 %355
    %v358 = vmul.f32 %v352, %v356
    %360 = vrot.lane.b32.xlu0 %v353, 32
    %v361 = vpop.permute.xlu0 %360
    %v363 = vmul.f32 %v352, %v361
    %365 = vrot.lane.b32.xlu0 %v363, 32
    %v366 = vpop.permute.xlu0 %365
    %v368 = vadd.f32 %v358, %v366
    %v369 = vtanh.pop %v368
    %371 = vrot.lane.b32.xlu0 %v369, 32
    %v372 = vpop.permute.xlu0 %371
    %v374 = vmul.f32 %v352, %v372
    %s375 = sadd.s32 8, %s269
    %s376 = scalar_lea.vmem [#allocation2], %s375
    %v377 = vld [vmem:[%s376] sm:$0xff]
    %379 = vrot.lane.b32.xlu0 %v374, 64
    %v380 = vpop.permute.xlu0 %379
    %v381 = vsel %vm272, %v380, 0
    %383 = vmatprep.subr.mxu0 0.0
    %384 = vmatpush1.msra.mxu0 %v255
    %385 = vmatprep.subr.mxu0 0.0
    %386 = vmatpush1.msra.mxu0 %v256
    %387 = vmatprep.subr.mxu0 0.0
    %388 = vmatpush1.msra.mxu0 %v257
    %389 = vmatprep.subr.mxu0 0.0
    %390 = vmatpush1.msra.mxu0 %v258
    %391 = vmatprep.subr.mxu0 0.0
    %392 = vmatpush1.msra.mxu0 0.0
    %393 = vmatprep.subr.mxu0 0.0
    %394 = vmatpush1.msra.mxu0 0.0
    %395 = vmatprep.subr.mxu0 0.0
    %396 = vmatpush1.msra.mxu0 0.0
    %397 = vmatprep.subr.mxu0 0.0
    %398 = vmatpush1.msra.mxu0 0.0
    %399 = vmatprep.subr.mxu0 0.0
    %400 = vmatpush1.msra.mxu0 0.0
    %401 = vmatprep.subr.mxu0 0.0
    %402 = vmatpush1.msra.mxu0 0.0
    %403 = vmatprep.subr.mxu0 0.0
    %404 = vmatpush1.msra.mxu0 0.0
    %405 = vmatprep.subr.mxu0 0.0
    %406 = vmatpush1.msra.mxu0 0.0
    %407 = vmatprep.subr.mxu0 0.0
    %408 = vmatpush1.msra.mxu0 0.0
    %409 = vmatprep.subr.mxu0 0.0
    %410 = vmatpush1.msra.mxu0 0.0
    %411 = vmatprep.subr.mxu0 0.0
    %412 = vmatpush1.msra.mxu0 0.0
    %413 = vmatprep.subr.mxu0 0.0
    %414 = vmatpush1.msra.mxu0 0.0
    %415 = vmatprep.subr.mxu0 0.0
    %416 = vmatpush1.msra.mxu0 0.0
    %417 = vmatprep.subr.mxu0 0.0
    %418 = vmatpush1.msra.mxu0 0.0
    %419 = vmatprep.subr.mxu0 0.0
    %420 = vmatpush1.msra.mxu0 0.0
    %421 = vmatprep.subr.mxu0 0.0
    %422 = vmatpush1.msra.mxu0 0.0
    %423 = vmatprep.subr.mxu0 0.0
    %424 = vmatpush1.msra.mxu0 0.0
    %425 = vmatprep.subr.mxu0 0.0
    %426 = vmatpush1.msra.mxu0 0.0
    %427 = vmatprep.subr.mxu0 0.0
    %428 = vmatpush1.msra.mxu0 0.0
    %429 = vmatprep.subr.mxu0 0.0
    %430 = vmatpush1.msra.mxu0 0.0
    %431 = vmatprep.subr.mxu0 0.0
    %432 = vmatpush1.msra.mxu0 0.0
    %433 = vmatprep.subr.mxu0 0.0
    %434 = vmatpush1.msra.mxu0 0.0
    %435 = vmatprep.subr.mxu0 0.0
    %436 = vmatpush1.msra.mxu0 0.0
    %437 = vmatprep.subr.mxu0 0.0
    %438 = vmatpush1.msra.mxu0 0.0
    %439 = vmatprep.subr.mxu0 0.0
    %440 = vmatpush1.msra.mxu0 0.0
    %441 = vmatprep.subr.mxu0 0.0
    %442 = vmatpush1.msra.mxu0 0.0
    %443 = vmatprep.subr.mxu0 0.0
    %444 = vmatpush1.msra.mxu0 0.0
    %445 = vmatprep.subr.mxu0 0.0
    %446 = vmatpush1.msra.mxu0 0.0
    %447 = vmatprep.mubr.f32.mxu0 0.0
    %448 = vmatmul.mubr.f32.gmra.mrb[0].mxu0 %v381
    %v449 = vpop.f32.mrb[0].mxu0
    %v450 = vadd.f32 0.0, %v449
    %v451 = vpop.f32.mrb[0].mxu0
    %452 = vdwg.mxu0
    %v453 = vadd.f32 %v377, %v450
    %v454 = vxor.u32 %v453, 2147483648
    %v455 = vmul.f32 %v454, 1.442695
    %v456 = vpow.pop %v455
    %v457 = vadd.f32 %v456, 1.0
    %v458 = vrcp.pop %v457
    %v459 = vmul.f32 1.0, %v458
    %v460 = vtanh.pop %v453
    %v461 = vmul.f32 %v459, %v368
    %463 = vrot.lane.b32.xlu0 %v460, 32
    %v464 = vpop.permute.xlu0 %463
    %v466 = vmul.f32 %v459, %v464
    %468 = vrot.lane.b32.xlu0 %v466, 32
    %v469 = vpop.permute.xlu0 %468
    %v471 = vadd.f32 %v461, %v469
    %v472 = vtanh.pop %v471
    %474 = vrot.lane.b32.xlu0 %v472, 32
    %v475 = vpop.permute.xlu0 %474
    %v477 = vmul.f32 %v459, %v475
    %s478 = sadd.s32 16, %s269
    %s479 = scalar_lea.vmem [#allocation2], %s478
    %v480 = vld [vmem:[%s479] sm:$0xff]
    %482 = vrot.lane.b32.xlu0 %v477, 64
    %v483 = vpop.permute.xlu0 %482
    %v484 = vsel %vm272, %v483, 0
    %486 = vmatprep.subr.mxu0 0.0
    %487 = vmatpush1.msra.mxu0 %v255
    %488 = vmatprep.subr.mxu0 0.0
    %489 = vmatpush1.msra.mxu0 %v256
    %490 = vmatprep.subr.mxu0 0.0
    %491 = vmatpush1.msra.mxu0 %v257
    %492 = vmatprep.subr.mxu0 0.0
    %493 = vmatpush1.msra.mxu0 %v258
    %494 = vmatprep.subr.mxu0 0.0
    %495 = vmatpush1.msra.mxu0 0.0
    %496 = vmatprep.subr.mxu0 0.0
    %497 = vmatpush1.msra.mxu0 0.0
    %498 = vmatprep.subr.mxu0 0.0
    %499 = vmatpush1.msra.mxu0 0.0
    %500 = vmatprep.subr.mxu0 0.0
    %501 = vmatpush1.msra.mxu0 0.0
    %502 = vmatprep.subr.mxu0 0.0
    %503 = vmatpush1.msra.mxu0 0.0
    %504 = vmatprep.subr.mxu0 0.0
    %505 = vmatpush1.msra.mxu0 0.0
    %506 = vmatprep.subr.mxu0 0.0
    %507 = vmatpush1.msra.mxu0 0.0
    %508 = vmatprep.subr.mxu0 0.0
    %509 = vmatpush1.msra.mxu0 0.0
    %510 = vmatprep.subr.mxu0 0.0
    %511 = vmatpush1.msra.mxu0 0.0
    %512 = vmatprep.subr.mxu0 0.0
    %513 = vmatpush1.msra.mxu0 0.0
    %514 = vmatprep.subr.mxu0 0.0
    %515 = vmatpush1.msra.mxu0 0.0
    %516 = vmatprep.subr.mxu0 0.0
    %517 = vmatpush1.msra.mxu0 0.0
    %518 = vmatprep.subr.mxu0 0.0
    %519 = vmatpush1.msra.mxu0 0.0
    %520 = vmatprep.subr.mxu0 0.0
    %521 = vmatpush1.msra.mxu0 0.0
    %522 = vmatprep.subr.mxu0 0.0
    %523 = vmatpush1.msra.mxu0 0.0
    %524 = vmatprep.subr.mxu0 0.0
    %525 = vmatpush1.msra.mxu0 0.0
    %526 = vmatprep.subr.mxu0 0.0
    %527 = vmatpush1.msra.mxu0 0.0
    %528 = vmatprep.subr.mxu0 0.0
    %529 = vmatpush1.msra.mxu0 0.0
    %530 = vmatprep.subr.mxu0 0.0
    %531 = vmatpush1.msra.mxu0 0.0
    %532 = vmatprep.subr.mxu0 0.0
    %533 = vmatpush1.msra.mxu0 0.0
    %534 = vmatprep.subr.mxu0 0.0
    %535 = vmatpush1.msra.mxu0 0.0
    %536 = vmatprep.subr.mxu0 0.0
    %537 = vmatpush1.msra.mxu0 0.0
    %538 = vmatprep.subr.mxu0 0.0
    %539 = vmatpush1.msra.mxu0 0.0
    %540 = vmatprep.subr.mxu0 0.0
    %541 = vmatpush1.msra.mxu0 0.0
    %542 = vmatprep.subr.mxu0 0.0
    %543 = vmatpush1.msra.mxu0 0.0
    %544 = vmatprep.subr.mxu0 0.0
    %545 = vmatpush1.msra.mxu0 0.0
    %546 = vmatprep.subr.mxu0 0.0
    %547 = vmatpush1.msra.mxu0 0.0
    %548 = vmatprep.subr.mxu0 0.0
    %549 = vmatpush1.msra.mxu0 0.0
    %550 = vmatprep.mubr.f32.mxu0 0.0
    %551 = vmatmul.mubr.f32.gmra.mrb[0].mxu0 %v484
    %v552 = vpop.f32.mrb[0].mxu0
    %v553 = vadd.f32 0.0, %v552
    %v554 = vpop.f32.mrb[0].mxu0
    %555 = vdwg.mxu0
    %v556 = vadd.f32 %v480, %v553
    %v557 = vxor.u32 %v556, 2147483648
    %v558 = vmul.f32 %v557, 1.442695
    %v559 = vpow.pop %v558
    %v560 = vadd.f32 %v559, 1.0
    %v561 = vrcp.pop %v560
    %v562 = vmul.f32 1.0, %v561
    %v563 = vtanh.pop %v556
    %v564 = vmul.f32 %v562, %v471
    %566 = vrot.lane.b32.xlu0 %v563, 32
    %v567 = vpop.permute.xlu0 %566
    %v569 = vmul.f32 %v562, %v567
    %571 = vrot.lane.b32.xlu0 %v569, 32
    %v572 = vpop.permute.xlu0 %571
    %v574 = vadd.f32 %v564, %v572
    %v575 = vtanh.pop %v574
    %577 = vrot.lane.b32.xlu0 %v575, 32
    %v578 = vpop.permute.xlu0 %577
    %v580 = vmul.f32 %v562, %v578
    %s581 = sadd.s32 24, %s269
    %s582 = scalar_lea.vmem [#allocation2], %s581
    %v583 = vld [vmem:[%s582] sm:$0xff]
    %585 = vrot.lane.b32.xlu0 %v580, 64
    %v586 = vpop.permute.xlu0 %585
    %v587 = vsel %vm272, %v586, 0
    %589 = vmatprep.subr.mxu0 0.0
    %590 = vmatpush1.msra.mxu0 %v255
    %591 = vmatprep.subr.mxu0 0.0
    %592 = vmatpush1.msra.mxu0 %v256
    %593 = vmatprep.subr.mxu0 0.0
    %594 = vmatpush1.msra.mxu0 %v257
    %595 = vmatprep.subr.mxu0 0.0
    %596 = vmatpush1.msra.mxu0 %v258
    %597 = vmatprep.subr.mxu0 0.0
    %598 = vmatpush1.msra.mxu0 0.0
    %599 = vmatprep.subr.mxu0 0.0
    %600 = vmatpush1.msra.mxu0 0.0
    %601 = vmatprep.subr.mxu0 0.0
    %602 = vmatpush1.msra.mxu0 0.0
    %603 = vmatprep.subr.mxu0 0.0
    %604 = vmatpush1.msra.mxu0 0.0
    %605 = vmatprep.subr.mxu0 0.0
    %606 = vmatpush1.msra.mxu0 0.0
    %607 = vmatprep.subr.mxu0 0.0
    %608 = vmatpush1.msra.mxu0 0.0
    %609 = vmatprep.subr.mxu0 0.0
    %610 = vmatpush1.msra.mxu0 0.0
    %611 = vmatprep.subr.mxu0 0.0
    %612 = vmatpush1.msra.mxu0 0.0
    %613 = vmatprep.subr.mxu0 0.0
    %614 = vmatpush1.msra.mxu0 0.0
    %615 = vmatprep.subr.mxu0 0.0
    %616 = vmatpush1.msra.mxu0 0.0
    %617 = vmatprep.subr.mxu0 0.0
    %618 = vmatpush1.msra.mxu0 0.0
    %619 = vmatprep.subr.mxu0 0.0
    %620 = vmatpush1.msra.mxu0 0.0
    %621 = vmatprep.subr.mxu0 0.0
    %622 = vmatpush1.msra.mxu0 0.0
    %623 = vmatprep.subr.mxu0 0.0
    %624 = vmatpush1.msra.mxu0 0.0
    %625 = vmatprep.subr.mxu0 0.0
    %626 = vmatpush1.msra.mxu0 0.0
    %627 = vmatprep.subr.mxu0 0.0
    %628 = vmatpush1.msra.mxu0 0.0
    %629 = vmatprep.subr.mxu0 0.0
    %630 = vmatpush1.msra.mxu0 0.0
    %631 = vmatprep.subr.mxu0 0.0
    %632 = vmatpush1.msra.mxu0 0.0
    %633 = vmatprep.subr.mxu0 0.0
    %634 = vmatpush1.msra.mxu0 0.0
    %635 = vmatprep.subr.mxu0 0.0
    %636 = vmatpush1.msra.mxu0 0.0
    %637 = vmatprep.subr.mxu0 0.0
    %638 = vmatpush1.msra.mxu0 0.0
    %639 = vmatprep.subr.mxu0 0.0
    %640 = vmatpush1.msra.mxu0 0.0
    %641 = vmatprep.subr.mxu0 0.0
    %642 = vmatpush1.msra.mxu0 0.0
    %643 = vmatprep.subr.mxu0 0.0
    %644 = vmatpush1.msra.mxu0 0.0
    %645 = vmatprep.subr.mxu0 0.0
    %646 = vmatpush1.msra.mxu0 0.0
    %647 = vmatprep.subr.mxu0 0.0
    %648 = vmatpush1.msra.mxu0 0.0
    %649 = vmatprep.subr.mxu0 0.0
    %650 = vmatpush1.msra.mxu0 0.0
    %651 = vmatprep.subr.mxu0 0.0
    %652 = vmatpush1.msra.mxu0 0.0
    %653 = vmatprep.mubr.f32.mxu0 0.0
    %654 = vmatmul.mubr.f32.gmra.mrb[0].mxu0 %v587
    %v655 = vpop.f32.mrb[0].mxu0
    %v656 = vadd.f32 0.0, %v655
    %v657 = vpop.f32.mrb[0].mxu0
    %658 = vdwg.mxu0
    %v659 = vadd.f32 %v583, %v656
    %v660 = vxor.u32 %v659, 2147483648
    %v661 = vmul.f32 %v660, 1.442695
    %v662 = vpow.pop %v661
    %v663 = vadd.f32 %v662, 1.0
    %v664 = vrcp.pop %v663
    %v665 = vmul.f32 1.0, %v664
    %v666 = vtanh.pop %v659
    %v667 = vmul.f32 %v665, %v574
    %669 = vrot.lane.b32.xlu0 %v666, 32
    %v670 = vpop.permute.xlu0 %669
    %v672 = vmul.f32 %v665, %v670
    %674 = vrot.lane.b32.xlu0 %v672, 32
    %v675 = vpop.permute.xlu0 %674
    %v677 = vadd.f32 %v667, %v675
    %v678 = vtanh.pop %v677
    %680 = vrot.lane.b32.xlu0 %v678, 32
    %v681 = vpop.permute.xlu0 %680
    %v683 = vmul.f32 %v665, %v681
    %s684 = sadd.s32 32, %s269
    %s685 = scalar_lea.vmem [#allocation2], %s684
    %v686 = vld [vmem:[%s685] sm:$0xff]
    %688 = vrot.lane.b32.xlu0 %v683, 64
    %v689 = vpop.permute.xlu0 %688
    %v690 = vsel %vm272, %v689, 0
    %692 = vmatprep.subr.mxu0 0.0
    %693 = vmatpush1.msra.mxu0 %v255
    %694 = vmatprep.subr.mxu0 0.0
    %695 = vmatpush1.msra.mxu0 %v256
    %696 = vmatprep.subr.mxu0 0.0
    %697 = vmatpush1.msra.mxu0 %v257
    %698 = vmatprep.subr.mxu0 0.0
    %699 = vmatpush1.msra.mxu0 %v258
    %700 = vmatprep.subr.mxu0 0.0
    %701 = vmatpush1.msra.mxu0 0.0
    %702 = vmatprep.subr.mxu0 0.0
    %703 = vmatpush1.msra.mxu0 0.0
    %704 = vmatprep.subr.mxu0 0.0
    %705 = vmatpush1.msra.mxu0 0.0
    %706 = vmatprep.subr.mxu0 0.0
    %707 = vmatpush1.msra.mxu0 0.0
    %708 = vmatprep.subr.mxu0 0.0
    %709 = vmatpush1.msra.mxu0 0.0
    %710 = vmatprep.subr.mxu0 0.0
    %711 = vmatpush1.msra.mxu0 0.0
    %712 = vmatprep.subr.mxu0 0.0
    %713 = vmatpush1.msra.mxu0 0.0
    %714 = vmatprep.subr.mxu0 0.0
    %715 = vmatpush1.msra.mxu0 0.0
    %716 = vmatprep.subr.mxu0 0.0
    %717 = vmatpush1.msra.mxu0 0.0
    %718 = vmatprep.subr.mxu0 0.0
    %719 = vmatpush1.msra.mxu0 0.0
    %720 = vmatprep.subr.mxu0 0.0
    %721 = vmatpush1.msra.mxu0 0.0
    %722 = vmatprep.subr.mxu0 0.0
    %723 = vmatpush1.msra.mxu0 0.0
    %724 = vmatprep.subr.mxu0 0.0
    %725 = vmatpush1.msra.mxu0 0.0
    %726 = vmatprep.subr.mxu0 0.0
    %727 = vmatpush1.msra.mxu0 0.0
    %728 = vmatprep.subr.mxu0 0.0
    %729 = vmatpush1.msra.mxu0 0.0
    %730 = vmatprep.subr.mxu0 0.0
    %731 = vmatpush1.msra.mxu0 0.0
    %732 = vmatprep.subr.mxu0 0.0
    %733 = vmatpush1.msra.mxu0 0.0
    %734 = vmatprep.subr.mxu0 0.0
    %735 = vmatpush1.msra.mxu0 0.0
    %736 = vmatprep.subr.mxu0 0.0
    %737 = vmatpush1.msra.mxu0 0.0
    %738 = vmatprep.subr.mxu0 0.0
    %739 = vmatpush1.msra.mxu0 0.0
    %740 = vmatprep.subr.mxu0 0.0
    %741 = vmatpush1.msra.mxu0 0.0
    %742 = vmatprep.subr.mxu0 0.0
    %743 = vmatpush1.msra.mxu0 0.0
    %744 = vmatprep.subr.mxu0 0.0
    %745 = vmatpush1.msra.mxu0 0.0
    %746 = vmatprep.subr.mxu0 0.0
    %747 = vmatpush1.msra.mxu0 0.0
    %748 = vmatprep.subr.mxu0 0.0
    %749 = vmatpush1.msra.mxu0 0.0
    %750 = vmatprep.subr.mxu0 0.0
    %751 = vmatpush1.msra.mxu0 0.0
    %752 = vmatprep.subr.mxu0 0.0
    %753 = vmatpush1.msra.mxu0 0.0
    %754 = vmatprep.subr.mxu0 0.0
    %755 = vmatpush1.msra.mxu0 0.0
    %756 = vmatprep.mubr.f32.mxu0 0.0
    %757 = vmatmul.mubr.f32.gmra.mrb[0].mxu0 %v690
    %v758 = vpop.f32.mrb[0].mxu0
    %v759 = vadd.f32 0.0, %v758
    %v760 = vpop.f32.mrb[0].mxu0
    %761 = vdwg.mxu0
    %v762 = vadd.f32 %v686, %v759
    %v763 = vxor.u32 %v762, 2147483648
    %v764 = vmul.f32 %v763, 1.442695
    %v765 = vpow.pop %v764
    %v766 = vadd.f32 %v765, 1.0
    %v767 = vrcp.pop %v766
    %v768 = vmul.f32 1.0, %v767
    %v769 = vtanh.pop %v762
    %v770 = vmul.f32 %v768, %v677
    %772 = vrot.lane.b32.xlu0 %v769, 32
    %v773 = vpop.permute.xlu0 %772
    %v775 = vmul.f32 %v768, %v773
    %777 = vrot.lane.b32.xlu0 %v775, 32
    %v778 = vpop.permute.xlu0 %777
    %v780 = vadd.f32 %v770, %v778
    %v781 = vtanh.pop %v780
    %783 = vrot.lane.b32.xlu0 %v781, 32
    %v784 = vpop.permute.xlu0 %783
    %v786 = vmul.f32 %v768, %v784
    %s787 = sadd.s32 40, %s269
    %s788 = scalar_lea.vmem [#allocation2], %s787
    %v789 = vld [vmem:[%s788] sm:$0xff]
    %791 = vrot.lane.b32.xlu0 %v786, 64
    %v792 = vpop.permute.xlu0 %791
    %v793 = vsel %vm272, %v792, 0
    %795 = vmatprep.subr.mxu0 0.0
    %796 = vmatpush1.msra.mxu0 %v255
    %797 = vmatprep.subr.mxu0 0.0
    %798 = vmatpush1.msra.mxu0 %v256
    %799 = vmatprep.subr.mxu0 0.0
    %800 = vmatpush1.msra.mxu0 %v257
    %801 = vmatprep.subr.mxu0 0.0
    %802 = vmatpush1.msra.mxu0 %v258
    %803 = vmatprep.subr.mxu0 0.0
    %804 = vmatpush1.msra.mxu0 0.0
    %805 = vmatprep.subr.mxu0 0.0
    %806 = vmatpush1.msra.mxu0 0.0
    %807 = vmatprep.subr.mxu0 0.0
    %808 = vmatpush1.msra.mxu0 0.0
    %809 = vmatprep.subr.mxu0 0.0
    %810 = vmatpush1.msra.mxu0 0.0
    %811 = vmatprep.subr.mxu0 0.0
    %812 = vmatpush1.msra.mxu0 0.0
    %813 = vmatprep.subr.mxu0 0.0
    %814 = vmatpush1.msra.mxu0 0.0
    %815 = vmatprep.subr.mxu0 0.0
    %816 = vmatpush1.msra.mxu0 0.0
    %817 = vmatprep.subr.mxu0 0.0
    %818 = vmatpush1.msra.mxu0 0.0
    %819 = vmatprep.subr.mxu0 0.0
    %820 = vmatpush1.msra.mxu0 0.0
    %821 = vmatprep.subr.mxu0 0.0
    %822 = vmatpush1.msra.mxu0 0.0
    %823 = vmatprep.subr.mxu0 0.0
    %824 = vmatpush1.msra.mxu0 0.0
    %825 = vmatprep.subr.mxu0 0.0
    %826 = vmatpush1.msra.mxu0 0.0
    %827 = vmatprep.subr.mxu0 0.0
    %828 = vmatpush1.msra.mxu0 0.0
    %829 = vmatprep.subr.mxu0 0.0
    %830 = vmatpush1.msra.mxu0 0.0
    %831 = vmatprep.subr.mxu0 0.0
    %832 = vmatpush1.msra.mxu0 0.0
    %833 = vmatprep.subr.mxu0 0.0
    %834 = vmatpush1.msra.mxu0 0.0
    %835 = vmatprep.subr.mxu0 0.0
    %836 = vmatpush1.msra.mxu0 0.0
    %837 = vmatprep.subr.mxu0 0.0
    %838 = vmatpush1.msra.mxu0 0.0
    %839 = vmatprep.subr.mxu0 0.0
    %840 = vmatpush1.msra.mxu0 0.0
    %841 = vmatprep.subr.mxu0 0.0
    %842 = vmatpush1.msra.mxu0 0.0
    %843 = vmatprep.subr.mxu0 0.0
    %844 = vmatpush1.msra.mxu0 0.0
    %845 = vmatprep.subr.mxu0 0.0
    %846 = vmatpush1.msra.mxu0 0.0
    %847 = vmatprep.subr.mxu0 0.0
    %848 = vmatpush1.msra.mxu0 0.0
    %849 = vmatprep.subr.mxu0 0.0
    %850 = vmatpush1.msra.mxu0 0.0
    %851 = vmatprep.subr.mxu0 0.0
    %852 = vmatpush1.msra.mxu0 0.0
    %853 = vmatprep.subr.mxu0 0.0
    %854 = vmatpush1.msra.mxu0 0.0
    %855 = vmatprep.subr.mxu0 0.0
    %856 = vmatpush1.msra.mxu0 0.0
    %857 = vmatprep.subr.mxu0 0.0
    %858 = vmatpush1.msra.mxu0 0.0
    %859 = vmatprep.mubr.f32.mxu0 0.0
    %860 = vmatmul.mubr.f32.gmra.mrb[0].mxu0 %v793
    %v861 = vpop.f32.mrb[0].mxu0
    %v862 = vadd.f32 0.0, %v861
    %v863 = vpop.f32.mrb[0].mxu0
    %864 = vdwg.mxu0
    %v865 = vadd.f32 %v789, %v862
    %v866 = vxor.u32 %v865, 2147483648
    %v867 = vmul.f32 %v866, 1.442695
    %v868 = vpow.pop %v867
    %v869 = vadd.f32 %v868, 1.0
    %v870 = vrcp.pop %v869
    %v871 = vmul.f32 1.0, %v870
    %v872 = vtanh.pop %v865
    %v873 = vmul.f32 %v871, %v780
    %875 = vrot.lane.b32.xlu0 %v872, 32
    %v876 = vpop.permute.xlu0 %875
    %v878 = vmul.f32 %v871, %v876
    %880 = vrot.lane.b32.xlu0 %v878, 32
    %v881 = vpop.permute.xlu0 %880
    %v883 = vadd.f32 %v873, %v881
    %v884 = vtanh.pop %v883
    %886 = vrot.lane.b32.xlu0 %v884, 32
    %v887 = vpop.permute.xlu0 %886
    %v889 = vmul.f32 %v871, %v887
    %s890 = sadd.s32 48, %s269
    %s891 = scalar_lea.vmem [#allocation2], %s890
    %v892 = vld [vmem:[%s891] sm:$0xff]
    %894 = vrot.lane.b32.xlu0 %v889, 64
    %v895 = vpop.permute.xlu0 %894
    %v896 = vsel %vm272, %v895, 0
    %898 = vmatprep.subr.mxu0 0.0
    %899 = vmatpush1.msra.mxu0 %v255
    %900 = vmatprep.subr.mxu0 0.0
    %901 = vmatpush1.msra.mxu0 %v256
    %902 = vmatprep.subr.mxu0 0.0
    %903 = vmatpush1.msra.mxu0 %v257
    %904 = vmatprep.subr.mxu0 0.0
    %905 = vmatpush1.msra.mxu0 %v258
    %906 = vmatprep.subr.mxu0 0.0
    %907 = vmatpush1.msra.mxu0 0.0
    %908 = vmatprep.subr.mxu0 0.0
    %909 = vmatpush1.msra.mxu0 0.0
    %910 = vmatprep.subr.mxu0 0.0
    %911 = vmatpush1.msra.mxu0 0.0
    %912 = vmatprep.subr.mxu0 0.0
    %913 = vmatpush1.msra.mxu0 0.0
    %914 = vmatprep.subr.mxu0 0.0
    %915 = vmatpush1.msra.mxu0 0.0
    %916 = vmatprep.subr.mxu0 0.0
    %917 = vmatpush1.msra.mxu0 0.0
    %918 = vmatprep.subr.mxu0 0.0
    %919 = vmatpush1.msra.mxu0 0.0
    %920 = vmatprep.subr.mxu0 0.0
    %921 = vmatpush1.msra.mxu0 0.0
    %922 = vmatprep.subr.mxu0 0.0
    %923 = vmatpush1.msra.mxu0 0.0
    %924 = vmatprep.subr.mxu0 0.0
    %925 = vmatpush1.msra.mxu0 0.0
    %926 = vmatprep.subr.mxu0 0.0
    %927 = vmatpush1.msra.mxu0 0.0
    %928 = vmatprep.subr.mxu0 0.0
    %929 = vmatpush1.msra.mxu0 0.0
    %930 = vmatprep.subr.mxu0 0.0
    %931 = vmatpush1.msra.mxu0 0.0
    %932 = vmatprep.subr.mxu0 0.0
    %933 = vmatpush1.msra.mxu0 0.0
    %934 = vmatprep.subr.mxu0 0.0
    %935 = vmatpush1.msra.mxu0 0.0
    %936 = vmatprep.subr.mxu0 0.0
    %937 = vmatpush1.msra.mxu0 0.0
    %938 = vmatprep.subr.mxu0 0.0
    %939 = vmatpush1.msra.mxu0 0.0
    %940 = vmatprep.subr.mxu0 0.0
    %941 = vmatpush1.msra.mxu0 0.0
    %942 = vmatprep.subr.mxu0 0.0
    %943 = vmatpush1.msra.mxu0 0.0
    %944 = vmatprep.subr.mxu0 0.0
    %945 = vmatpush1.msra.mxu0 0.0
    %946 = vmatprep.subr.mxu0 0.0
    %947 = vmatpush1.msra.mxu0 0.0
    %948 = vmatprep.subr.mxu0 0.0
    %949 = vmatpush1.msra.mxu0 0.0
    %950 = vmatprep.subr.mxu0 0.0
    %951 = vmatpush1.msra.mxu0 0.0
    %952 = vmatprep.subr.mxu0 0.0
    %953 = vmatpush1.msra.mxu0 0.0
    %954 = vmatprep.subr.mxu0 0.0
    %955 = vmatpush1.msra.mxu0 0.0
    %956 = vmatprep.subr.mxu0 0.0
    %957 = vmatpush1.msra.mxu0 0.0
    %958 = vmatprep.subr.mxu0 0.0
    %959 = vmatpush1.msra.mxu0 0.0
    %960 = vmatprep.subr.mxu0 0.0
    %961 = vmatpush1.msra.mxu0 0.0
    %962 = vmatprep.mubr.f32.mxu0 0.0
    %963 = vmatmul.mubr.f32.gmra.mrb[0].mxu0 %v896
    %v964 = vpop.f32.mrb[0].mxu0
    %v965 = vadd.f32 0.0, %v964
    %v966 = vpop.f32.mrb[0].mxu0
    %967 = vdwg.mxu0
    %v968 = vadd.f32 %v892, %v965
    %v969 = vxor.u32 %v968, 2147483648
    %v970 = vmul.f32 %v969, 1.442695
    %v971 = vpow.pop %v970
    %v972 = vadd.f32 %v971, 1.0
    %v973 = vrcp.pop %v972
    %v974 = vmul.f32 1.0, %v973
    %v975 = vtanh.pop %v968
    %v976 = vmul.f32 %v974, %v883
    %978 = vrot.lane.b32.xlu0 %v975, 32
    %v979 = vpop.permute.xlu0 %978
    %v981 = vmul.f32 %v974, %v979
    %983 = vrot.lane.b32.xlu0 %v981, 32
    %v984 = vpop.permute.xlu0 %983
    %v986 = vadd.f32 %v976, %v984
    %v987 = vtanh.pop %v986
    %989 = vrot.lane.b32.xlu0 %v987, 32
    %v990 = vpop.permute.xlu0 %989
    %v992 = vmul.f32 %v974, %v990
    %s993 = sadd.s32 56, %s269
    %s994 = scalar_lea.vmem [#allocation2], %s993
    %v995 = vld [vmem:[%s994] sm:$0xff]
    %997 = vrot.lane.b32.xlu0 %v992, 64
    %v998 = vpop.permute.xlu0 %997
    %v999 = vsel %vm272, %v998, 0
    %1001 = vmatprep.subr.mxu0 0.0
    %1002 = vmatpush1.msra.mxu0 %v255
    %1003 = vmatprep.subr.mxu0 0.0
    %1004 = vmatpush1.msra.mxu0 %v256
    %1005 = vmatprep.subr.mxu0 0.0
    %1006 = vmatpush1.msra.mxu0 %v257
    %1007 = vmatprep.subr.mxu0 0.0
    %1008 = vmatpush1.msra.mxu0 %v258
    %1009 = vmatprep.subr.mxu0 0.0
    %1010 = vmatpush1.msra.mxu0 0.0
    %1011 = vmatprep.subr.mxu0 0.0
    %1012 = vmatpush1.msra.mxu0 0.0
    %1013 = vmatprep.subr.mxu0 0.0
    %1014 = vmatpush1.msra.mxu0 0.0
    %1015 = vmatprep.subr.mxu0 0.0
    %1016 = vmatpush1.msra.mxu0 0.0
    %1017 = vmatprep.subr.mxu0 0.0
    %1018 = vmatpush1.msra.mxu0 0.0
    %1019 = vmatprep.subr.mxu0 0.0
    %1020 = vmatpush1.msra.mxu0 0.0
    %1021 = vmatprep.subr.mxu0 0.0
    %1022 = vmatpush1.msra.mxu0 0.0
    %1023 = vmatprep.subr.mxu0 0.0
    %1024 = vmatpush1.msra.mxu0 0.0
    %1025 = vmatprep.subr.mxu0 0.0
    %1026 = vmatpush1.msra.mxu0 0.0
    %1027 = vmatprep.subr.mxu0 0.0
    %1028 = vmatpush1.msra.mxu0 0.0
    %1029 = vmatprep.subr.mxu0 0.0
    %1030 = vmatpush1.msra.mxu0 0.0
    %1031 = vmatprep.subr.mxu0 0.0
    %1032 = vmatpush1.msra.mxu0 0.0
    %1033 = vmatprep.subr.mxu0 0.0
    %1034 = vmatpush1.msra.mxu0 0.0
    %1035 = vmatprep.subr.mxu0 0.0
    %1036 = vmatpush1.msra.mxu0 0.0
    %1037 = vmatprep.subr.mxu0 0.0
    %1038 = vmatpush1.msra.mxu0 0.0
    %1039 = vmatprep.subr.mxu0 0.0
    %1040 = vmatpush1.msra.mxu0 0.0
    %1041 = vmatprep.subr.mxu0 0.0
    %1042 = vmatpush1.msra.mxu0 0.0
    %1043 = vmatprep.subr.mxu0 0.0
    %1044 = vmatpush1.msra.mxu0 0.0
    %1045 = vmatprep.subr.mxu0 0.0
    %1046 = vmatpush1.msra.mxu0 0.0
    %1047 = vmatprep.subr.mxu0 0.0
    %1048 = vmatpush1.msra.mxu0 0.0
    %1049 = vmatprep.subr.mxu0 0.0
    %1050 = vmatpush1.msra.mxu0 0.0
    %1051 = vmatprep.subr.mxu0 0.0
    %1052 = vmatpush1.msra.mxu0 0.0
    %1053 = vmatprep.subr.mxu0 0.0
    %1054 = vmatpush1.msra.mxu0 0.0
    %1055 = vmatprep.subr.mxu0 0.0
    %1056 = vmatpush1.msra.mxu0 0.0
    %1057 = vmatprep.subr.mxu0 0.0
    %1058 = vmatpush1.msra.mxu0 0.0
    %1059 = vmatprep.subr.mxu0 0.0
    %1060 = vmatpush1.msra.mxu0 0.0
    %1061 = vmatprep.subr.mxu0 0.0
    %1062 = vmatpush1.msra.mxu0 0.0
    %1063 = vmatprep.subr.mxu0 0.0
    %1064 = vmatpush1.msra.mxu0 0.0
    %1065 = vmatprep.mubr.f32.mxu0 0.0
    %1066 = vmatmul.mubr.f32.gmra.mrb[0].mxu0 %v999
    %v1067 = vpop.f32.mrb[0].mxu0
    %v1068 = vadd.f32 0.0, %v1067
    %v1069 = vpop.f32.mrb[0].mxu0
    %1070 = vdwg.mxu0
    %v1071 = vadd.f32 %v995, %v1068
    %v1072 = vxor.u32 %v1071, 2147483648
    %v1073 = vmul.f32 %v1072, 1.442695
    %v1074 = vpow.pop %v1073
    %v1075 = vadd.f32 %v1074, 1.0
    %v1076 = vrcp.pop %v1075
    %v1077 = vmul.f32 1.0, %v1076
    %v1078 = vtanh.pop %v1071
    %v1079 = vmul.f32 %v1077, %v986
    %1081 = vrot.lane.b32.xlu0 %v1078, 32
    %v1082 = vpop.permute.xlu0 %1081
    %v1084 = vmul.f32 %v1077, %v1082
    %1086 = vrot.lane.b32.xlu0 %v1084, 32
    %v1087 = vpop.permute.xlu0 %1086
    %v1089 = vadd.f32 %v1079, %v1087
    %v1090 = vtanh.pop %v1089
    %1092 = vrot.lane.b32.xlu0 %v1090, 32
    %v1093 = vpop.permute.xlu0 %1092
    %v1095 = vmul.f32 %v1077, %v1093
    %1097 = vrot.lane.b32.xlu0 %v1095, 64
    %v1098 = vpop.permute.xlu0 %1097
    %1100 = vst.msk [vmem:[#allocation3] sm:$0xff] %vm272, %v1098
    %1102 = vrot.lane.b32.xlu0 %v1089, 96
    %v1103 = vpop.permute.xlu0 %1102
    %1105 = vst.msk [vmem:[#allocation4] sm:$0xff] %vm272, %v1103
    %s1106 = sadd.s32 0, 1
    %p1107 = scmp.lt.s32.totalorder %s1106, 1
    // Predicated region
    $region50: #{tpu_custom_call.1} parent=1 // pred_check
      %p1108 = pneg %p1107
    $region51: #{tpu_custom_call.1} parent=1 // pred_check_branch
      %1110 = sbr.rel (%p1108) target = $region53
    $region52: #{tpu_custom_call.1} parent=1 // pred_region
      %v1111 = vld [vmem:[#allocation8] sm:$0xff]
      %v1112 = vld [vmem:[#allocation8 + $0x8] sm:$0xff]
      %v1113 = vld [vmem:[#allocation8 + $0x10] sm:$0xff]
      %v1114 = vld [vmem:[#allocation8 + $0x18] sm:$0xff]
      %v1115 = vld [vmem:[#allocation8 + $0x20] sm:$0xff]
      %v1116 = vld [vmem:[#allocation8 + $0x28] sm:$0xff]
      %v1117 = vld [vmem:[#allocation8 + $0x30] sm:$0xff]
      %v1118 = vld [vmem:[#allocation8 + $0x38] sm:$0xff]
      %v1119 = vld [vmem:[#allocation10] sm:$0xff]
      %v1120 = vld [vmem:[#allocation10 + $0x8] sm:$0xff]
      %v1121 = vld [vmem:[%s4] sm:$0x1]
      %v1123 = vlaneseq
      %v1124 = vshrl.u32 %v1123, 7
      %v1125 = vsub.s32 0, %v1124
      %v1126 = vrot.slane %v1121, %v1125
      %vm1128 = vcmask 130048
      %v1130 = vsel %vm1128, %v1111, 0
      %v1133 = vsel %vm1128, %v1112, 0
      %v1136 = vsel %vm1128, %v1113, 0
      %v1139 = vsel %vm1128, %v1114, 0
      %v1142 = vsel %vm1128, %v1115, 0
      %v1145 = vsel %vm1128, %v1116, 0
      %v1148 = vsel %vm1128, %v1117, 0
      %v1151 = vsel %vm1128, %v1118, 0
      %1153 = vmatprep.subr.mxu0 0.0
      %1154 = vmatpush1.msra.mxu0 %v1119
      %1155 = vmatprep.subr.mxu0 0.0
      %1156 = vmatpush1.msra.mxu0 %v1120
      %1157 = vmatprep.subr.mxu0 0.0
      %1158 = vmatpush1.msra.mxu0 0.0
      %1159 = vmatprep.subr.mxu0 0.0
      %1160 = vmatpush1.msra.mxu0 0.0
      %1161 = vmatprep.subr.mxu0 0.0
      %1162 = vmatpush1.msra.mxu0 0.0
      %1163 = vmatprep.subr.mxu0 0.0
      %1164 = vmatpush1.msra.mxu0 0.0
      %1165 = vmatprep.subr.mxu0 0.0
      %1166 = vmatpush1.msra.mxu0 0.0
      %1167 = vmatprep.subr.mxu0 0.0
      %1168 = vmatpush1.msra.mxu0 0.0
      %1169 = vmatprep.subr.mxu0 0.0
      %1170 = vmatpush1.msra.mxu0 0.0
      %1171 = vmatprep.subr.mxu0 0.0
      %1172 = vmatpush1.msra.mxu0 0.0
      %1173 = vmatprep.subr.mxu0 0.0
      %1174 = vmatpush1.msra.mxu0 0.0
      %1175 = vmatprep.subr.mxu0 0.0
      %1176 = vmatpush1.msra.mxu0 0.0
      %1177 = vmatprep.subr.mxu0 0.0
      %1178 = vmatpush1.msra.mxu0 0.0
      %1179 = vmatprep.subr.mxu0 0.0
      %1180 = vmatpush1.msra.mxu0 0.0
      %1181 = vmatprep.subr.mxu0 0.0
      %1182 = vmatpush1.msra.mxu0 0.0
      %1183 = vmatprep.subr.mxu0 0.0
      %1184 = vmatpush1.msra.mxu0 0.0
      %1185 = vmatprep.subr.mxu0 0.0
      %1186 = vmatpush1.msra.mxu0 0.0
      %1187 = vmatprep.subr.mxu0 0.0
      %1188 = vmatpush1.msra.mxu0 0.0
      %1189 = vmatprep.subr.mxu0 0.0
      %1190 = vmatpush1.msra.mxu0 0.0
      %1191 = vmatprep.subr.mxu0 0.0
      %1192 = vmatpush1.msra.mxu0 0.0
      %1193 = vmatprep.subr.mxu0 0.0
      %1194 = vmatpush1.msra.mxu0 0.0
      %1195 = vmatprep.subr.mxu0 0.0
      %1196 = vmatpush1.msra.mxu0 0.0
      %1197 = vmatprep.subr.mxu0 0.0
      %1198 = vmatpush1.msra.mxu0 0.0
      %1199 = vmatprep.subr.mxu0 0.0
      %1200 = vmatpush1.msra.mxu0 0.0
      %1201 = vmatprep.subr.mxu0 0.0
      %1202 = vmatpush1.msra.mxu0 0.0
      %1203 = vmatprep.subr.mxu0 0.0
      %1204 = vmatpush1.msra.mxu0 0.0
      %1205 = vmatprep.subr.mxu0 0.0
      %1206 = vmatpush1.msra.mxu0 0.0
      %1207 = vmatprep.subr.mxu0 0.0
      %1208 = vmatpush1.msra.mxu0 0.0
      %1209 = vmatprep.subr.mxu0 0.0
      %1210 = vmatpush1.msra.mxu0 0.0
      %1211 = vmatprep.subr.mxu0 0.0
      %1212 = vmatpush1.msra.mxu0 0.0
      %1213 = vmatprep.subr.mxu0 0.0
      %1214 = vmatpush1.msra.mxu0 0.0
      %1215 = vmatprep.subr.mxu0 0.0
      %1216 = vmatpush1.msra.mxu0 0.0
      %1217 = vmatprep.mubr.f32.mxu0 0.0
      %1218 = vmatmul.mubr.f32.gmra.mrb[0].mxu0 %v1130
      %v1219 = vpop.f32.mrb[0].mxu0
      %v1220 = vadd.f32 %v1126, %v1219
      %v1221 = vpop.f32.mrb[0].mxu0
      %1222 = vmatprep.mubr.f32.mxu0 0.0
      %1223 = vmatmul.mubr.f32.gmra.mrb[0].mxu0 %v1133
      %v1224 = vpop.f32.mrb[0].mxu0
      %v1225 = vadd.f32 %v1126, %v1224
      %v1226 = vpop.f32.mrb[0].mxu0
      %1227 = vmatprep.mubr.f32.mxu0 0.0
      %1228 = vmatmul.mubr.f32.gmra.mrb[0].mxu0 %v1136
      %v1229 = vpop.f32.mrb[0].mxu0
      %v1230 = vadd.f32 %v1126, %v1229
      %v1231 = vpop.f32.mrb[0].mxu0
      %1232 = vmatprep.mubr.f32.mxu0 0.0
      %1233 = vmatmul.mubr.f32.gmra.mrb[0].mxu0 %v1139
      %v1234 = vpop.f32.mrb[0].mxu0
      %v1235 = vadd.f32 %v1126, %v1234
      %v1236 = vpop.f32.mrb[0].mxu0
      %1237 = vmatprep.mubr.f32.mxu0 0.0
      %1238 = vmatmul.mubr.f32.gmra.mrb[0].mxu0 %v1142
      %v1239 = vpop.f32.mrb[0].mxu0
      %v1240 = vadd.f32 %v1126, %v1239
      %v1241 = vpop.f32.mrb[0].mxu0
      %1242 = vmatprep.mubr.f32.mxu0 0.0
      %1243 = vmatmul.mubr.f32.gmra.mrb[0].mxu0 %v1145
      %v1244 = vpop.f32.mrb[0].mxu0
      %v1245 = vadd.f32 %v1126, %v1244
      %v1246 = vpop.f32.mrb[0].mxu0
      %1247 = vmatprep.mubr.f32.mxu0 0.0
      %1248 = vmatmul.mubr.f32.gmra.mrb[0].mxu0 %v1148
      %v1249 = vpop.f32.mrb[0].mxu0
      %v1250 = vadd.f32 %v1126, %v1249
      %v1251 = vpop.f32.mrb[0].mxu0
      %1252 = vmatprep.mubr.f32.mxu0 0.0
      %1253 = vmatmul.mubr.f32.gmra.mrb[0].mxu0 %v1151
      %v1254 = vpop.f32.mrb[0].mxu0
      %v1255 = vadd.f32 %v1126, %v1254
      %v1256 = vpop.f32.mrb[0].mxu0
      %1257 = vdwg.mxu0
      %p1258 = scmp.lt.s32.totalorder %s1106, 0
      %s1259 = ssub.s32 0, %s1106
      %s1260 = scalar_select %p1258, %s1259, %s1106
      %s1261 = sand.u32 %s1260, 1
      %s1262 = ssub.s32 0, %s1261
      %s1263 = scalar_select %p1258, %s1262, %s1261
      %p1264 = scmp.ne.s32.totalorder %s1263, 0
      %p1265 = scmp.lt.s32.totalorder %s1263, 0
      %p1266 = pnand %p1265, %p1264
      %p1267 = pneg %p1266
      %s1268 = sadd.s32 %s1263, 2
      %s1269 = scalar_select %p1267, %s1268, %s1263
      %s1270 = smul.u32 %s1269, 64
      %s1271 = scalar_lea.vmem [#allocation2], %s1270
      %1272 = vst [vmem:[%s1271] sm:$0xff] %v1220
      %1273 = vst [vmem:[%s1271 + $0x8] sm:$0xff] %v1225
      %1274 = vst [vmem:[%s1271 + $0x10] sm:$0xff] %v1230
      %1275 = vst [vmem:[%s1271 + $0x18] sm:$0xff] %v1235
      %1276 = vst [vmem:[%s1271 + $0x20] sm:$0xff] %v1240
      %1277 = vst [vmem:[%s1271 + $0x28] sm:$0xff] %v1245
      %1278 = vst [vmem:[%s1271 + $0x30] sm:$0xff] %v1250
      %1279 = vst [vmem:[%s1271 + $0x38] sm:$0xff] %v1255
    $region53: #{tpu_custom_call.1} parent=1 // pred_fallthru
      _
    // Predicated region
    $region54: #{tpu_custom_call.1} parent=1 // pred_check
      %p1280 = pneg %p93
    $region55: #{tpu_custom_call.1} parent=1 // pred_check_branch
      %1282 = sbr.rel (%p1280) target = $region57
    $region56: #{tpu_custom_call.1} parent=1 // pred_region
      %v1283 = vld [vmem:[%s5] sm:$0x1]
      %v1285 = vlaneseq
      %v1286 = vshrl.u32 %v1285, 7
      %v1287 = vsub.s32 0, %v1286
      %v1288 = vrot.slane %v1283, %v1287
      %1289 = vrot.lane.b32.xlu0 %v1288, 64
      %v1290 = vpop.permute.xlu0 %1289
      %v1292 = vmul.f32 %v1095, %v1290
      %1294 = vrot.lane.b32.xlu0 %v1292, 64
      %v1295 = vpop.permute.xlu0 %1294
      %v1297 = vsel %vm272, %v1295, 0.0
      %1298 = vadd.xlane.f32.xlu0 %v1297
      %v1299 = vpop.xlane.xlu0 %1298
      %v1300 = vld [vmem:[#allocation5] sm:$0x1]
      %v1302 = vlaneseq
      %v1303 = vshrl.u32 %v1302, 7
      %v1304 = vsub.s32 0, %v1303
      %v1305 = vrot.slane %v1300, %v1304
      %v1307 = vadd.f32 %v1299, %v1305
      %v1308 = vxor.u32 %v1307, 2147483648
      %v1309 = vmul.f32 %v1308, 1.442695
      %v1310 = vpow.pop %v1309
      %v1311 = vadd.f32 %v1310, 1.0
      %v1312 = vrcp.pop %v1311
      %v1313 = vmul.f32 1.0, %v1312
      %vm1314 = vcmask 7168
      %1315 = vst.msk [vmem:[%s7] sm:$0xff] %vm1314, %v1313
    $region57: #{tpu_custom_call.1} parent=1 // pred_fallthru
      _
    // Predicated region
    $region58: #{tpu_custom_call.1} parent=1 // pred_check
      _
    $region59: #{tpu_custom_call.1} parent=1 // pred_check_branch
      %1317 = sbr.rel (0) target = $region61
    $region60: #{tpu_custom_call.1} parent=1 // pred_region
      _
    $region61: #{tpu_custom_call.1} parent=1 // pred_fallthru
      _
    // Predicated region
    $region62: #{tpu_custom_call.1} parent=1 // pred_check
      _
    $region63: #{tpu_custom_call.1} parent=1 // pred_check_branch
      %1319 = sbr.rel (0) target = $region65
    $region64: #{tpu_custom_call.1} parent=1 // pred_region
      _
    $region65: #{tpu_custom_call.1} parent=1 // pred_fallthru
      _
    %1320 = vsyncpa [#allocation7], 1
    %1321 = vsyncpa [#allocation9], 1
    %1322 = vsyncpa [#allocation12], 1

</llo_original>
